<compile_context>
chip_gen: v5e
topology: v5e:2x2
jax: 0.10.0
libtpu: 0.0.40
codegen_flags: <defaults>
</compile_context>

<pallas_src>
import functools

import jax
import jax.numpy as jnp
from jax import lax
from jax.experimental import pallas as pl
from jax.experimental.pallas import tpu as pltpu


def _dilated_conv_kernel(x_ref, w1_ref, b1_ref, w2_ref, b2_ref, o_ref, xw_ref,
                         *, K, d, P, L, TL, NT, C_in, C_out, E, W):
    """Grid = (batch, L-tile).

    x_ref : (1, C_in, L)        full-length input for this batch element
    w1_ref: (C_out, C_in*K)     conv1 weight, flat index ci*K + t
    b1_ref: (C_out, 1)
    w2_ref: (C_out, C_out*K)    conv2 weight, flat index c*K + t
    b2_ref: (C_out, 1)
    o_ref : (1, C_out, TL)      output tile
    xw_ref: VMEM (C_in, L+4P)   zero-padded copy of x, built once per batch element
    """
    j = pl.program_id(1)

    # ---- stage x into the zero-padded scratch once per batch element ----
    @pl.when(j == 0)
    def _():
        if P > 0:
            xw_ref[:, 0:2 * P] = jnp.zeros((C_in, 2 * P), jnp.float32)
            xw_ref[:, 2 * P + L:] = jnp.zeros((C_in, 2 * P), jnp.float32)
        xw_ref[:, 2 * P:2 * P + L] = x_ref[0].astype(jnp.float32)

    # ---- padded-input window needed by this output tile (lane-aligned start) ----
    if NT == 1:
        xwin = xw_ref[:, 0:W]                                  # (C_in, W), static
    else:
        base = pl.multiple_of(j * TL, TL)                      # TL is a multiple of 128
        xwin = xw_ref[:, pl.ds(base, W)]                       # (C_in, W)

    # ---- conv1 over the halo-extended range; bias folded into the init (VPU FMAs) ----
    acc1 = jnp.broadcast_to(b1_ref[...], (C_out, E))
    for t in range(K):
        xt = xwin[:, t * d:t * d + E]                          # (C_in, E)
        for ci in range(C_in):
            idx = ci * K + t
            acc1 = acc1 + w1_ref[:, idx:idx + 1] * xt[ci:ci + 1, :]

    # conv2's zero padding: intermediate positions outside [0, L) must be 0 (not bias).
    pos = j * TL - P + lax.broadcasted_iota(jnp.int32, (1, E), 1)
    h = jnp.where((pos >= 0) & (pos < L), acc1, 0.0)           # (C_out, E), stays in vregs

    # ---- conv2 on the tile (VPU FMAs, bias folded in) ----
    acc2 = jnp.broadcast_to(b2_ref[...], (C_out, TL))
    for t in range(K):
        ht = h[:, t * d:t * d + TL]                            # (C_out, TL)
        for c in range(C_out):
            idx = c * K + t
            acc2 = acc2 + w2_ref[:, idx:idx + 1] * ht[c:c + 1, :]

    # ---- SiLU (Dropout1d is identity in eval mode) ----
    o_ref[0] = (acc2 * jax.nn.sigmoid(acc2)).astype(o_ref.dtype)


def dilated_conv_layer(x, w1, b1, w2, b2, *, kernel_size, padding, dilation):
    """x: (N, C_in, L) float32.  w1: (C_out, C_in, K), w2: (C_out, C_out, K)."""
    N, C_in, L = x.shape
    C_out = w1.shape[0]
    K, d, P = kernel_size, dilation, padding
    if 2 * P != d * (K - 1):
        raise ValueError("kernel assumes same-length convs: 2*padding == dilation*(K-1)")

    # Lane-dense L tile (multiple of 128) whenever possible.
    TL = L
    for cand in (512, 256, 128):
        if L % cand == 0:
            TL = cand
            break
    NT = L // TL
    E = TL + 2 * P          # conv1 halo-extended tile width
    W = TL + 4 * P          # padded-input window width per tile

    # Glue (no jnp.pad of x): flatten weights so each (channel, tap) is a static column.
    w1m = w1.reshape(C_out, C_in * K)     # [co, ci*K + t]
    w2m = w2.reshape(C_out, C_out * K)    # [co, c*K + t]
    b1c = b1[:, None]
    b2c = b2[:, None]

    kernel = functools.partial(_dilated_conv_kernel, K=K, d=d, P=P, L=L, TL=TL, NT=NT,
                               C_in=C_in, C_out=C_out, E=E, W=W)

    return pl.pallas_call(
        kernel,
        out_shape=jax.ShapeDtypeStruct((N, C_out, L), x.dtype),
        grid=(N, NT),
        in_specs=[
            pl.BlockSpec((1, C_in, L), lambda n, j: (n, 0, 0)),
            pl.BlockSpec((C_out, C_in * K), lambda n, j: (0, 0)),
            pl.BlockSpec((C_out, 1), lambda n, j: (0, 0)),
            pl.BlockSpec((C_out, C_out * K), lambda n, j: (0, 0)),
            pl.BlockSpec((C_out, 1), lambda n, j: (0, 0)),
        ],
        out_specs=pl.BlockSpec((1, C_out, TL), lambda n, j: (n, 0, j)),
        scratch_shapes=[pltpu.VMEM((C_in, L + 4 * P), jnp.float32)],
        compiler_params=pltpu.CompilerParams(
            dimension_semantics=("parallel", "arbitrary")),
    )(x, w1m, b1c, w2m, b2c)


def _ref_forward(x, w1, b1, w2, b2, *, padding, dilation):
    """Pure-JAX reference (matches torch Conv1d / SiLU in eval mode)."""
    def conv1d(x, w, b):
        y = lax.conv_general_dilated(
            x, w, window_strides=(1,), padding=[(padding, padding)],
            rhs_dilation=(dilation,),
            dimension_numbers=("NCH", "OIH", "NCH"),
            precision=lax.Precision.HIGHEST)
        return y + b[None, :, None]
    h = conv1d(x, w1, b1)
    h = conv1d(h, w2, b2)
    return h * jax.nn.sigmoid(h)  # SiLU; Dropout1d(eval) = identity


if __name__ == "__main__":
    # Module hyperparameters (chosen so output length == input length)
    in_channels, out_channels = 4, 8
    kernel_size, dilation = 3, 2
    padding = dilation * (kernel_size - 1) // 2  # = 2
    dropout_rate = 0.1  # unused in eval mode
    N, L = 2, 1024      # L lane-dense -> 2 L-tiles of 512 per batch element

    key = jax.random.PRNGKey(0)
    kx, k1, kb1, k2, kb2 = jax.random.split(key, 5)

    x = jax.random.normal(kx, (N, in_channels, L), dtype=jnp.float32)

    # Deterministic parameter init (uniform, like torch Conv1d default ranges)
    bound1 = 1.0 / (in_channels * kernel_size) ** 0.5
    w1 = jax.random.uniform(k1, (out_channels, in_channels, kernel_size),
                            minval=-bound1, maxval=bound1, dtype=jnp.float32)
    b1 = jax.random.uniform(kb1, (out_channels,), minval=-bound1, maxval=bound1,
                            dtype=jnp.float32)
    bound2 = 1.0 / (out_channels * kernel_size) ** 0.5
    w2 = jax.random.uniform(k2, (out_channels, out_channels, kernel_size),
                            minval=-bound2, maxval=bound2, dtype=jnp.float32)
    b2 = jax.random.uniform(kb2, (out_channels,), minval=-bound2, maxval=bound2,
                            dtype=jnp.float32)

    out = dilated_conv_layer(x, w1, b1, w2, b2, kernel_size=kernel_size,
                             padding=padding, dilation=dilation)
    out = jax.block_until_ready(out)

    ref = _ref_forward(x, w1, b1, w2, b2, padding=padding, dilation=dilation)
    assert out.shape == (N, out_channels, L)
    assert jnp.allclose(out, ref, atol=1e-4, rtol=1e-4), "mismatch vs reference"

    # TODO(synk): training-mode Dropout1d (channel dropout) omitted; eval-mode forward only.
    print("KERNEL_OK")
</pallas_src>

<mosaic_0001>
module attributes {stable_mosaic.version = 11 : i64} {
  func.func @_dilated_conv_kernel(%arg0: i32, %arg1: i32, %arg2: memref<1x4x1024xf32, #tpu.memory_space<vmem>>, %arg3: memref<8x12xf32, #tpu.memory_space<vmem>>, %arg4: memref<8x1xf32, #tpu.memory_space<vmem>>, %arg5: memref<8x24xf32, #tpu.memory_space<vmem>>, %arg6: memref<8x1xf32, #tpu.memory_space<vmem>>, %arg7: memref<1x8x512xf32, #tpu.memory_space<vmem>>, %arg8: memref<4x1032xf32, #tpu.memory_space<vmem>>) attributes {dimension_semantics = [#tpu.dimension_semantics<parallel>, #tpu.dimension_semantics<arbitrary>], iteration_bounds = array<i64: 2, 2>, scalar_prefetch = 0 : i64, scratch_operands = 1 : i64, tpu.core_type = #tpu.core_type<tc>, window_params = [{transform_indices = @transform_0, window_bounds = array<i64: 1, 4, 1024>}, {pipeline_mode = #tpu.pipeline_mode<synchronous>, transform_indices = @transform_1, window_bounds = array<i64: 8, 12>}, {pipeline_mode = #tpu.pipeline_mode<synchronous>, transform_indices = @transform_2, window_bounds = array<i64: 8, 1>}, {pipeline_mode = #tpu.pipeline_mode<synchronous>, transform_indices = @transform_3, window_bounds = array<i64: 8, 24>}, {pipeline_mode = #tpu.pipeline_mode<synchronous>, transform_indices = @transform_4, window_bounds = array<i64: 8, 1>}, {transform_indices = @transform_5, window_bounds = array<i64: 1, 8, 512>}]} {
    %c0_i32 = arith.constant 0 : i32
    %0 = arith.cmpi eq, %arg1, %c0_i32 : i32
    %1 = arith.extui %0 : i1 to i32
    %c0_i32_0 = arith.constant 0 : i32
    %2 = arith.cmpi ne, %1, %c0_i32_0 : i32
    scf.if %2 {
      %cst_60 = arith.constant 0.000000e+00 : f32
      %258 = vector.broadcast %cst_60 : f32 to vector<4x4xf32>
      %c0_61 = arith.constant 0 : index
      %c0_62 = arith.constant 0 : index
      %259 = vector.load %arg8[%c0_61, %c0_62] : memref<4x1032xf32, #tpu.memory_space<vmem>>, vector<4x4xf32>
      tpu.vector_store %arg8[%c0_61, %c0_62], %258 {strides = array<i32>} : memref<4x1032xf32, #tpu.memory_space<vmem>>, vector<4x4xf32>,
      %cst_63 = arith.constant 0.000000e+00 : f32
      %260 = vector.broadcast %cst_63 : f32 to vector<4x4xf32>
      %c0_64 = arith.constant 0 : index
      %c1028 = arith.constant 1028 : index
      %261 = vector.load %arg8[%c0_64, %c1028] : memref<4x1032xf32, #tpu.memory_space<vmem>>, vector<4x4xf32>
      tpu.vector_store %arg8[%c0_64, %c1028], %260 {strides = array<i32>} : memref<4x1032xf32, #tpu.memory_space<vmem>>, vector<4x4xf32>,
      %c0_65 = arith.constant 0 : index
      %c0_66 = arith.constant 0 : index
      %c0_67 = arith.constant 0 : index
      %262 = vector.load %arg2[%c0_65, %c0_66, %c0_67] : memref<1x4x1024xf32, #tpu.memory_space<vmem>>, vector<1x4x1024xf32>
      %263 = vector.shape_cast %262 : vector<1x4x1024xf32> to vector<4x1024xf32>
      %c0_68 = arith.constant 0 : index
      %c4_69 = arith.constant 4 : index
      %264 = vector.load %arg8[%c0_68, %c4_69] : memref<4x1032xf32, #tpu.memory_space<vmem>>, vector<4x1024xf32>
      tpu.vector_store %arg8[%c0_68, %c4_69], %263 {strides = array<i32>} : memref<4x1032xf32, #tpu.memory_space<vmem>>, vector<4x1024xf32>,
    } else {
    }
    %c512_i32 = arith.constant 512 : i32
    %3 = arith.muli %arg1, %c512_i32 : i32
    %4 = tpu.assume_multiple %3, 512 : i32
    %c0 = arith.constant 0 : index
    %5 = arith.index_cast %4 : i32 to index
    %6 = vector.load %arg8[%c0, %5] : memref<4x1032xf32, #tpu.memory_space<vmem>>, vector<4x520xf32>
    %c0_1 = arith.constant 0 : index
    %c0_2 = arith.constant 0 : index
    %7 = vector.load %arg4[%c0_1, %c0_2] : memref<8x1xf32, #tpu.memory_space<vmem>>, vector<8x1xf32>
    %8 = vector.shape_cast %7 : vector<8x1xf32> to vector<8x1xf32>
    %9 = vector.broadcast %8 : vector<8x1xf32> to vector<8x516xf32>
    %10 = vector.extract_strided_slice %6 {offsets = [0, 0], sizes = [4, 516], strides = [1, 1]} : vector<4x520xf32> to vector<4x516xf32>
    %c0_3 = arith.constant 0 : index
    %c0_4 = arith.constant 0 : index
    %11 = vector.load %arg3[%c0_3, %c0_4] : memref<8x12xf32, #tpu.memory_space<vmem>>, vector<8x1xf32>
    %12 = vector.extract_strided_slice %10 {offsets = [0, 0], sizes = [1, 516], strides = [1, 1]} : vector<4x516xf32> to vector<1x516xf32>
    %13 = vector.broadcast %11 : vector<8x1xf32> to vector<8x516xf32>
    %14 = vector.broadcast %12 : vector<1x516xf32> to vector<8x516xf32>
    %15 = arith.mulf %13, %14 : vector<8x516xf32>
    %16 = arith.addf %9, %15 : vector<8x516xf32>
    %c0_5 = arith.constant 0 : index
    %c3 = arith.constant 3 : index
    %17 = vector.load %arg3[%c0_5, %c3] : memref<8x12xf32, #tpu.memory_space<vmem>>, vector<8x1xf32>
    %18 = vector.extract_strided_slice %10 {offsets = [1, 0], sizes = [1, 516], strides = [1, 1]} : vector<4x516xf32> to vector<1x516xf32>
    %19 = vector.broadcast %17 : vector<8x1xf32> to vector<8x516xf32>
    %20 = vector.broadcast %18 : vector<1x516xf32> to vector<8x516xf32>
    %21 = arith.mulf %19, %20 : vector<8x516xf32>
    %22 = arith.addf %16, %21 : vector<8x516xf32>
    %c0_6 = arith.constant 0 : index
    %c6 = arith.constant 6 : index
    %23 = vector.load %arg3[%c0_6, %c6] : memref<8x12xf32, #tpu.memory_space<vmem>>, vector<8x1xf32>
    %24 = vector.extract_strided_slice %10 {offsets = [2, 0], sizes = [1, 516], strides = [1, 1]} : vector<4x516xf32> to vector<1x516xf32>
    %25 = vector.broadcast %23 : vector<8x1xf32> to vector<8x516xf32>
    %26 = vector.broadcast %24 : vector<1x516xf32> to vector<8x516xf32>
    %27 = arith.mulf %25, %26 : vector<8x516xf32>
    %28 = arith.addf %22, %27 : vector<8x516xf32>
    %c0_7 = arith.constant 0 : index
    %c9 = arith.constant 9 : index
    %29 = vector.load %arg3[%c0_7, %c9] : memref<8x12xf32, #tpu.memory_space<vmem>>, vector<8x1xf32>
    %30 = vector.extract_strided_slice %10 {offsets = [3, 0], sizes = [1, 516], strides = [1, 1]} : vector<4x516xf32> to vector<1x516xf32>
    %31 = vector.broadcast %29 : vector<8x1xf32> to vector<8x516xf32>
    %32 = vector.broadcast %30 : vector<1x516xf32> to vector<8x516xf32>
    %33 = arith.mulf %31, %32 : vector<8x516xf32>
    %34 = arith.addf %28, %33 : vector<8x516xf32>
    %35 = vector.extract_strided_slice %6 {offsets = [0, 2], sizes = [4, 516], strides = [1, 1]} : vector<4x520xf32> to vector<4x516xf32>
    %c0_8 = arith.constant 0 : index
    %c1 = arith.constant 1 : index
    %36 = vector.load %arg3[%c0_8, %c1] : memref<8x12xf32, #tpu.memory_space<vmem>>, vector<8x1xf32>
    %37 = vector.extract_strided_slice %35 {offsets = [0, 0], sizes = [1, 516], strides = [1, 1]} : vector<4x516xf32> to vector<1x516xf32>
    %38 = vector.broadcast %36 : vector<8x1xf32> to vector<8x516xf32>
    %39 = vector.broadcast %37 : vector<1x516xf32> to vector<8x516xf32>
    %40 = arith.mulf %38, %39 : vector<8x516xf32>
    %41 = arith.addf %34, %40 : vector<8x516xf32>
    %c0_9 = arith.constant 0 : index
    %c4 = arith.constant 4 : index
    %42 = vector.load %arg3[%c0_9, %c4] : memref<8x12xf32, #tpu.memory_space<vmem>>, vector<8x1xf32>
    %43 = vector.extract_strided_slice %35 {offsets = [1, 0], sizes = [1, 516], strides = [1, 1]} : vector<4x516xf32> to vector<1x516xf32>
    %44 = vector.broadcast %42 : vector<8x1xf32> to vector<8x516xf32>
    %45 = vector.broadcast %43 : vector<1x516xf32> to vector<8x516xf32>
    %46 = arith.mulf %44, %45 : vector<8x516xf32>
    %47 = arith.addf %41, %46 : vector<8x516xf32>
    %c0_10 = arith.constant 0 : index
    %c7 = arith.constant 7 : index
    %48 = vector.load %arg3[%c0_10, %c7] : memref<8x12xf32, #tpu.memory_space<vmem>>, vector<8x1xf32>
    %49 = vector.extract_strided_slice %35 {offsets = [2, 0], sizes = [1, 516], strides = [1, 1]} : vector<4x516xf32> to vector<1x516xf32>
    %50 = vector.broadcast %48 : vector<8x1xf32> to vector<8x516xf32>
    %51 = vector.broadcast %49 : vector<1x516xf32> to vector<8x516xf32>
    %52 = arith.mulf %50, %51 : vector<8x516xf32>
    %53 = arith.addf %47, %52 : vector<8x516xf32>
    %c0_11 = arith.constant 0 : index
    %c10 = arith.constant 10 : index
    %54 = vector.load %arg3[%c0_11, %c10] : memref<8x12xf32, #tpu.memory_space<vmem>>, vector<8x1xf32>
    %55 = vector.extract_strided_slice %35 {offsets = [3, 0], sizes = [1, 516], strides = [1, 1]} : vector<4x516xf32> to vector<1x516xf32>
    %56 = vector.broadcast %54 : vector<8x1xf32> to vector<8x516xf32>
    %57 = vector.broadcast %55 : vector<1x516xf32> to vector<8x516xf32>
    %58 = arith.mulf %56, %57 : vector<8x516xf32>
    %59 = arith.addf %53, %58 : vector<8x516xf32>
    %60 = vector.extract_strided_slice %6 {offsets = [0, 4], sizes = [4, 516], strides = [1, 1]} : vector<4x520xf32> to vector<4x516xf32>
    %c0_12 = arith.constant 0 : index
    %c2 = arith.constant 2 : index
    %61 = vector.load %arg3[%c0_12, %c2] : memref<8x12xf32, #tpu.memory_space<vmem>>, vector<8x1xf32>
    %62 = vector.extract_strided_slice %60 {offsets = [0, 0], sizes = [1, 516], strides = [1, 1]} : vector<4x516xf32> to vector<1x516xf32>
    %63 = vector.broadcast %61 : vector<8x1xf32> to vector<8x516xf32>
    %64 = vector.broadcast %62 : vector<1x516xf32> to vector<8x516xf32>
    %65 = arith.mulf %63, %64 : vector<8x516xf32>
    %66 = arith.addf %59, %65 : vector<8x516xf32>
    %c0_13 = arith.constant 0 : index
    %c5 = arith.constant 5 : index
    %67 = vector.load %arg3[%c0_13, %c5] : memref<8x12xf32, #tpu.memory_space<vmem>>, vector<8x1xf32>
    %68 = vector.extract_strided_slice %60 {offsets = [1, 0], sizes = [1, 516], strides = [1, 1]} : vector<4x516xf32> to vector<1x516xf32>
    %69 = vector.broadcast %67 : vector<8x1xf32> to vector<8x516xf32>
    %70 = vector.broadcast %68 : vector<1x516xf32> to vector<8x516xf32>
    %71 = arith.mulf %69, %70 : vector<8x516xf32>
    %72 = arith.addf %66, %71 : vector<8x516xf32>
    %c0_14 = arith.constant 0 : index
    %c8 = arith.constant 8 : index
    %73 = vector.load %arg3[%c0_14, %c8] : memref<8x12xf32, #tpu.memory_space<vmem>>, vector<8x1xf32>
    %74 = vector.extract_strided_slice %60 {offsets = [2, 0], sizes = [1, 516], strides = [1, 1]} : vector<4x516xf32> to vector<1x516xf32>
    %75 = vector.broadcast %73 : vector<8x1xf32> to vector<8x516xf32>
    %76 = vector.broadcast %74 : vector<1x516xf32> to vector<8x516xf32>
    %77 = arith.mulf %75, %76 : vector<8x516xf32>
    %78 = arith.addf %72, %77 : vector<8x516xf32>
    %c0_15 = arith.constant 0 : index
    %c11 = arith.constant 11 : index
    %79 = vector.load %arg3[%c0_15, %c11] : memref<8x12xf32, #tpu.memory_space<vmem>>, vector<8x1xf32>
    %80 = vector.extract_strided_slice %60 {offsets = [3, 0], sizes = [1, 516], strides = [1, 1]} : vector<4x516xf32> to vector<1x516xf32>
    %81 = vector.broadcast %79 : vector<8x1xf32> to vector<8x516xf32>
    %82 = vector.broadcast %80 : vector<1x516xf32> to vector<8x516xf32>
    %83 = arith.mulf %81, %82 : vector<8x516xf32>
    %84 = arith.addf %78, %83 : vector<8x516xf32>
    %c512_i32_16 = arith.constant 512 : i32
    %85 = arith.muli %arg1, %c512_i32_16 : i32
    %c2_i32 = arith.constant 2 : i32
    %86 = arith.subi %85, %c2_i32 : i32
    %87 = tpu.iota {dimensions = array<i32: 1>} : vector<1x516xi32>
    %88 = vector.broadcast %86 : i32 to vector<1x516xi32>
    %89 = arith.addi %88, %87 : vector<1x516xi32>
    %c0_i32_17 = arith.constant 0 : i32
    %90 = vector.broadcast %c0_i32_17 : i32 to vector<1x516xi32>
    %91 = arith.cmpi sge, %89, %90 : vector<1x516xi32>
    %c1024_i32 = arith.constant 1024 : i32
    %92 = vector.broadcast %c1024_i32 : i32 to vector<1x516xi32>
    %93 = arith.cmpi slt, %89, %92 : vector<1x516xi32>
    %94 = arith.andi %91, %93 : vector<1x516xi1>
    %cst = arith.constant 0.000000e+00 : f32
    %95 = vector.shape_cast %94 : vector<1x516xi1> to vector<1x516xi1>
    %96 = vector.broadcast %95 : vector<1x516xi1> to vector<8x516xi1>
    %97 = vector.broadcast %cst : f32 to vector<8x516xf32>
    %98 = arith.select %96, %84, %97 : vector<8x516xi1>, vector<8x516xf32>
    %c0_18 = arith.constant 0 : index
    %c0_19 = arith.constant 0 : index
    %99 = vector.load %arg6[%c0_18, %c0_19] : memref<8x1xf32, #tpu.memory_space<vmem>>, vector<8x1xf32>
    %100 = vector.shape_cast %99 : vector<8x1xf32> to vector<8x1xf32>
    %101 = vector.broadcast %100 : vector<8x1xf32> to vector<8x512xf32>
    %102 = vector.extract_strided_slice %98 {offsets = [0, 0], sizes = [8, 512], strides = [1, 1]} : vector<8x516xf32> to vector<8x512xf32>
    %c0_20 = arith.constant 0 : index
    %c0_21 = arith.constant 0 : index
    %103 = vector.load %arg5[%c0_20, %c0_21] : memref<8x24xf32, #tpu.memory_space<vmem>>, vector<8x1xf32>
    %104 = vector.extract_strided_slice %102 {offsets = [0, 0], sizes = [1, 512], strides = [1, 1]} : vector<8x512xf32> to vector<1x512xf32>
    %105 = vector.broadcast %103 : vector<8x1xf32> to vector<8x512xf32>
    %106 = vector.broadcast %104 : vector<1x512xf32> to vector<8x512xf32>
    %107 = arith.mulf %105, %106 : vector<8x512xf32>
    %108 = arith.addf %101, %107 : vector<8x512xf32>
    %c0_22 = arith.constant 0 : index
    %c3_23 = arith.constant 3 : index
    %109 = vector.load %arg5[%c0_22, %c3_23] : memref<8x24xf32, #tpu.memory_space<vmem>>, vector<8x1xf32>
    %110 = vector.extract_strided_slice %102 {offsets = [1, 0], sizes = [1, 512], strides = [1, 1]} : vector<8x512xf32> to vector<1x512xf32>
    %111 = vector.broadcast %109 : vector<8x1xf32> to vector<8x512xf32>
    %112 = vector.broadcast %110 : vector<1x512xf32> to vector<8x512xf32>
    %113 = arith.mulf %111, %112 : vector<8x512xf32>
    %114 = arith.addf %108, %113 : vector<8x512xf32>
    %c0_24 = arith.constant 0 : index
    %c6_25 = arith.constant 6 : index
    %115 = vector.load %arg5[%c0_24, %c6_25] : memref<8x24xf32, #tpu.memory_space<vmem>>, vector<8x1xf32>
    %116 = vector.extract_strided_slice %102 {offsets = [2, 0], sizes = [1, 512], strides = [1, 1]} : vector<8x512xf32> to vector<1x512xf32>
    %117 = vector.broadcast %115 : vector<8x1xf32> to vector<8x512xf32>
    %118 = vector.broadcast %116 : vector<1x512xf32> to vector<8x512xf32>
    %119 = arith.mulf %117, %118 : vector<8x512xf32>
    %120 = arith.addf %114, %119 : vector<8x512xf32>
    %c0_26 = arith.constant 0 : index
    %c9_27 = arith.constant 9 : index
    %121 = vector.load %arg5[%c0_26, %c9_27] : memref<8x24xf32, #tpu.memory_space<vmem>>, vector<8x1xf32>
    %122 = vector.extract_strided_slice %102 {offsets = [3, 0], sizes = [1, 512], strides = [1, 1]} : vector<8x512xf32> to vector<1x512xf32>
    %123 = vector.broadcast %121 : vector<8x1xf32> to vector<8x512xf32>
    %124 = vector.broadcast %122 : vector<1x512xf32> to vector<8x512xf32>
    %125 = arith.mulf %123, %124 : vector<8x512xf32>
    %126 = arith.addf %120, %125 : vector<8x512xf32>
    %c0_28 = arith.constant 0 : index
    %c12 = arith.constant 12 : index
    %127 = vector.load %arg5[%c0_28, %c12] : memref<8x24xf32, #tpu.memory_space<vmem>>, vector<8x1xf32>
    %128 = vector.extract_strided_slice %102 {offsets = [4, 0], sizes = [1, 512], strides = [1, 1]} : vector<8x512xf32> to vector<1x512xf32>
    %129 = vector.broadcast %127 : vector<8x1xf32> to vector<8x512xf32>
    %130 = vector.broadcast %128 : vector<1x512xf32> to vector<8x512xf32>
    %131 = arith.mulf %129, %130 : vector<8x512xf32>
    %132 = arith.addf %126, %131 : vector<8x512xf32>
    %c0_29 = arith.constant 0 : index
    %c15 = arith.constant 15 : index
    %133 = vector.load %arg5[%c0_29, %c15] : memref<8x24xf32, #tpu.memory_space<vmem>>, vector<8x1xf32>
    %134 = vector.extract_strided_slice %102 {offsets = [5, 0], sizes = [1, 512], strides = [1, 1]} : vector<8x512xf32> to vector<1x512xf32>
    %135 = vector.broadcast %133 : vector<8x1xf32> to vector<8x512xf32>
    %136 = vector.broadcast %134 : vector<1x512xf32> to vector<8x512xf32>
    %137 = arith.mulf %135, %136 : vector<8x512xf32>
    %138 = arith.addf %132, %137 : vector<8x512xf32>
    %c0_30 = arith.constant 0 : index
    %c18 = arith.constant 18 : index
    %139 = vector.load %arg5[%c0_30, %c18] : memref<8x24xf32, #tpu.memory_space<vmem>>, vector<8x1xf32>
    %140 = vector.extract_strided_slice %102 {offsets = [6, 0], sizes = [1, 512], strides = [1, 1]} : vector<8x512xf32> to vector<1x512xf32>
    %141 = vector.broadcast %139 : vector<8x1xf32> to vector<8x512xf32>
    %142 = vector.broadcast %140 : vector<1x512xf32> to vector<8x512xf32>
    %143 = arith.mulf %141, %142 : vector<8x512xf32>
    %144 = arith.addf %138, %143 : vector<8x512xf32>
    %c0_31 = arith.constant 0 : index
    %c21 = arith.constant 21 : index
    %145 = vector.load %arg5[%c0_31, %c21] : memref<8x24xf32, #tpu.memory_space<vmem>>, vector<8x1xf32>
    %146 = vector.extract_strided_slice %102 {offsets = [7, 0], sizes = [1, 512], strides = [1, 1]} : vector<8x512xf32> to vector<1x512xf32>
    %147 = vector.broadcast %145 : vector<8x1xf32> to vector<8x512xf32>
    %148 = vector.broadcast %146 : vector<1x512xf32> to vector<8x512xf32>
    %149 = arith.mulf %147, %148 : vector<8x512xf32>
    %150 = arith.addf %144, %149 : vector<8x512xf32>
    %151 = vector.extract_strided_slice %98 {offsets = [0, 2], sizes = [8, 512], strides = [1, 1]} : vector<8x516xf32> to vector<8x512xf32>
    %c0_32 = arith.constant 0 : index
    %c1_33 = arith.constant 1 : index
    %152 = vector.load %arg5[%c0_32, %c1_33] : memref<8x24xf32, #tpu.memory_space<vmem>>, vector<8x1xf32>
    %153 = vector.extract_strided_slice %151 {offsets = [0, 0], sizes = [1, 512], strides = [1, 1]} : vector<8x512xf32> to vector<1x512xf32>
    %154 = vector.broadcast %152 : vector<8x1xf32> to vector<8x512xf32>
    %155 = vector.broadcast %153 : vector<1x512xf32> to vector<8x512xf32>
    %156 = arith.mulf %154, %155 : vector<8x512xf32>
    %157 = arith.addf %150, %156 : vector<8x512xf32>
    %c0_34 = arith.constant 0 : index
    %c4_35 = arith.constant 4 : index
    %158 = vector.load %arg5[%c0_34, %c4_35] : memref<8x24xf32, #tpu.memory_space<vmem>>, vector<8x1xf32>
    %159 = vector.extract_strided_slice %151 {offsets = [1, 0], sizes = [1, 512], strides = [1, 1]} : vector<8x512xf32> to vector<1x512xf32>
    %160 = vector.broadcast %158 : vector<8x1xf32> to vector<8x512xf32>
    %161 = vector.broadcast %159 : vector<1x512xf32> to vector<8x512xf32>
    %162 = arith.mulf %160, %161 : vector<8x512xf32>
    %163 = arith.addf %157, %162 : vector<8x512xf32>
    %c0_36 = arith.constant 0 : index
    %c7_37 = arith.constant 7 : index
    %164 = vector.load %arg5[%c0_36, %c7_37] : memref<8x24xf32, #tpu.memory_space<vmem>>, vector<8x1xf32>
    %165 = vector.extract_strided_slice %151 {offsets = [2, 0], sizes = [1, 512], strides = [1, 1]} : vector<8x512xf32> to vector<1x512xf32>
    %166 = vector.broadcast %164 : vector<8x1xf32> to vector<8x512xf32>
    %167 = vector.broadcast %165 : vector<1x512xf32> to vector<8x512xf32>
    %168 = arith.mulf %166, %167 : vector<8x512xf32>
    %169 = arith.addf %163, %168 : vector<8x512xf32>
    %c0_38 = arith.constant 0 : index
    %c10_39 = arith.constant 10 : index
    %170 = vector.load %arg5[%c0_38, %c10_39] : memref<8x24xf32, #tpu.memory_space<vmem>>, vector<8x1xf32>
    %171 = vector.extract_strided_slice %151 {offsets = [3, 0], sizes = [1, 512], strides = [1, 1]} : vector<8x512xf32> to vector<1x512xf32>
    %172 = vector.broadcast %170 : vector<8x1xf32> to vector<8x512xf32>
    %173 = vector.broadcast %171 : vector<1x512xf32> to vector<8x512xf32>
    %174 = arith.mulf %172, %173 : vector<8x512xf32>
    %175 = arith.addf %169, %174 : vector<8x512xf32>
    %c0_40 = arith.constant 0 : index
    %c13 = arith.constant 13 : index
    %176 = vector.load %arg5[%c0_40, %c13] : memref<8x24xf32, #tpu.memory_space<vmem>>, vector<8x1xf32>
    %177 = vector.extract_strided_slice %151 {offsets = [4, 0], sizes = [1, 512], strides = [1, 1]} : vector<8x512xf32> to vector<1x512xf32>
    %178 = vector.broadcast %176 : vector<8x1xf32> to vector<8x512xf32>
    %179 = vector.broadcast %177 : vector<1x512xf32> to vector<8x512xf32>
    %180 = arith.mulf %178, %179 : vector<8x512xf32>
    %181 = arith.addf %175, %180 : vector<8x512xf32>
    %c0_41 = arith.constant 0 : index
    %c16 = arith.constant 16 : index
    %182 = vector.load %arg5[%c0_41, %c16] : memref<8x24xf32, #tpu.memory_space<vmem>>, vector<8x1xf32>
    %183 = vector.extract_strided_slice %151 {offsets = [5, 0], sizes = [1, 512], strides = [1, 1]} : vector<8x512xf32> to vector<1x512xf32>
    %184 = vector.broadcast %182 : vector<8x1xf32> to vector<8x512xf32>
    %185 = vector.broadcast %183 : vector<1x512xf32> to vector<8x512xf32>
    %186 = arith.mulf %184, %185 : vector<8x512xf32>
    %187 = arith.addf %181, %186 : vector<8x512xf32>
    %c0_42 = arith.constant 0 : index
    %c19 = arith.constant 19 : index
    %188 = vector.load %arg5[%c0_42, %c19] : memref<8x24xf32, #tpu.memory_space<vmem>>, vector<8x1xf32>
    %189 = vector.extract_strided_slice %151 {offsets = [6, 0], sizes = [1, 512], strides = [1, 1]} : vector<8x512xf32> to vector<1x512xf32>
    %190 = vector.broadcast %188 : vector<8x1xf32> to vector<8x512xf32>
    %191 = vector.broadcast %189 : vector<1x512xf32> to vector<8x512xf32>
    %192 = arith.mulf %190, %191 : vector<8x512xf32>
    %193 = arith.addf %187, %192 : vector<8x512xf32>
    %c0_43 = arith.constant 0 : index
    %c22 = arith.constant 22 : index
    %194 = vector.load %arg5[%c0_43, %c22] : memref<8x24xf32, #tpu.memory_space<vmem>>, vector<8x1xf32>
    %195 = vector.extract_strided_slice %151 {offsets = [7, 0], sizes = [1, 512], strides = [1, 1]} : vector<8x512xf32> to vector<1x512xf32>
    %196 = vector.broadcast %194 : vector<8x1xf32> to vector<8x512xf32>
    %197 = vector.broadcast %195 : vector<1x512xf32> to vector<8x512xf32>
    %198 = arith.mulf %196, %197 : vector<8x512xf32>
    %199 = arith.addf %193, %198 : vector<8x512xf32>
    %200 = vector.extract_strided_slice %98 {offsets = [0, 4], sizes = [8, 512], strides = [1, 1]} : vector<8x516xf32> to vector<8x512xf32>
    %c0_44 = arith.constant 0 : index
    %c2_45 = arith.constant 2 : index
    %201 = vector.load %arg5[%c0_44, %c2_45] : memref<8x24xf32, #tpu.memory_space<vmem>>, vector<8x1xf32>
    %202 = vector.extract_strided_slice %200 {offsets = [0, 0], sizes = [1, 512], strides = [1, 1]} : vector<8x512xf32> to vector<1x512xf32>
    %203 = vector.broadcast %201 : vector<8x1xf32> to vector<8x512xf32>
    %204 = vector.broadcast %202 : vector<1x512xf32> to vector<8x512xf32>
    %205 = arith.mulf %203, %204 : vector<8x512xf32>
    %206 = arith.addf %199, %205 : vector<8x512xf32>
    %c0_46 = arith.constant 0 : index
    %c5_47 = arith.constant 5 : index
    %207 = vector.load %arg5[%c0_46, %c5_47] : memref<8x24xf32, #tpu.memory_space<vmem>>, vector<8x1xf32>
    %208 = vector.extract_strided_slice %200 {offsets = [1, 0], sizes = [1, 512], strides = [1, 1]} : vector<8x512xf32> to vector<1x512xf32>
    %209 = vector.broadcast %207 : vector<8x1xf32> to vector<8x512xf32>
    %210 = vector.broadcast %208 : vector<1x512xf32> to vector<8x512xf32>
    %211 = arith.mulf %209, %210 : vector<8x512xf32>
    %212 = arith.addf %206, %211 : vector<8x512xf32>
    %c0_48 = arith.constant 0 : index
    %c8_49 = arith.constant 8 : index
    %213 = vector.load %arg5[%c0_48, %c8_49] : memref<8x24xf32, #tpu.memory_space<vmem>>, vector<8x1xf32>
    %214 = vector.extract_strided_slice %200 {offsets = [2, 0], sizes = [1, 512], strides = [1, 1]} : vector<8x512xf32> to vector<1x512xf32>
    %215 = vector.broadcast %213 : vector<8x1xf32> to vector<8x512xf32>
    %216 = vector.broadcast %214 : vector<1x512xf32> to vector<8x512xf32>
    %217 = arith.mulf %215, %216 : vector<8x512xf32>
    %218 = arith.addf %212, %217 : vector<8x512xf32>
    %c0_50 = arith.constant 0 : index
    %c11_51 = arith.constant 11 : index
    %219 = vector.load %arg5[%c0_50, %c11_51] : memref<8x24xf32, #tpu.memory_space<vmem>>, vector<8x1xf32>
    %220 = vector.extract_strided_slice %200 {offsets = [3, 0], sizes = [1, 512], strides = [1, 1]} : vector<8x512xf32> to vector<1x512xf32>
    %221 = vector.broadcast %219 : vector<8x1xf32> to vector<8x512xf32>
    %222 = vector.broadcast %220 : vector<1x512xf32> to vector<8x512xf32>
    %223 = arith.mulf %221, %222 : vector<8x512xf32>
    %224 = arith.addf %218, %223 : vector<8x512xf32>
    %c0_52 = arith.constant 0 : index
    %c14 = arith.constant 14 : index
    %225 = vector.load %arg5[%c0_52, %c14] : memref<8x24xf32, #tpu.memory_space<vmem>>, vector<8x1xf32>
    %226 = vector.extract_strided_slice %200 {offsets = [4, 0], sizes = [1, 512], strides = [1, 1]} : vector<8x512xf32> to vector<1x512xf32>
    %227 = vector.broadcast %225 : vector<8x1xf32> to vector<8x512xf32>
    %228 = vector.broadcast %226 : vector<1x512xf32> to vector<8x512xf32>
    %229 = arith.mulf %227, %228 : vector<8x512xf32>
    %230 = arith.addf %224, %229 : vector<8x512xf32>
    %c0_53 = arith.constant 0 : index
    %c17 = arith.constant 17 : index
    %231 = vector.load %arg5[%c0_53, %c17] : memref<8x24xf32, #tpu.memory_space<vmem>>, vector<8x1xf32>
    %232 = vector.extract_strided_slice %200 {offsets = [5, 0], sizes = [1, 512], strides = [1, 1]} : vector<8x512xf32> to vector<1x512xf32>
    %233 = vector.broadcast %231 : vector<8x1xf32> to vector<8x512xf32>
    %234 = vector.broadcast %232 : vector<1x512xf32> to vector<8x512xf32>
    %235 = arith.mulf %233, %234 : vector<8x512xf32>
    %236 = arith.addf %230, %235 : vector<8x512xf32>
    %c0_54 = arith.constant 0 : index
    %c20 = arith.constant 20 : index
    %237 = vector.load %arg5[%c0_54, %c20] : memref<8x24xf32, #tpu.memory_space<vmem>>, vector<8x1xf32>
    %238 = vector.extract_strided_slice %200 {offsets = [6, 0], sizes = [1, 512], strides = [1, 1]} : vector<8x512xf32> to vector<1x512xf32>
    %239 = vector.broadcast %237 : vector<8x1xf32> to vector<8x512xf32>
    %240 = vector.broadcast %238 : vector<1x512xf32> to vector<8x512xf32>
    %241 = arith.mulf %239, %240 : vector<8x512xf32>
    %242 = arith.addf %236, %241 : vector<8x512xf32>
    %c0_55 = arith.constant 0 : index
    %c23 = arith.constant 23 : index
    %243 = vector.load %arg5[%c0_55, %c23] : memref<8x24xf32, #tpu.memory_space<vmem>>, vector<8x1xf32>
    %244 = vector.extract_strided_slice %200 {offsets = [7, 0], sizes = [1, 512], strides = [1, 1]} : vector<8x512xf32> to vector<1x512xf32>
    %245 = vector.broadcast %243 : vector<8x1xf32> to vector<8x512xf32>
    %246 = vector.broadcast %244 : vector<1x512xf32> to vector<8x512xf32>
    %247 = arith.mulf %245, %246 : vector<8x512xf32>
    %248 = arith.addf %242, %247 : vector<8x512xf32>
    %249 = arith.negf %248 : vector<8x512xf32>
    %250 = math.exp %249 : vector<8x512xf32>
    %cst_56 = arith.constant 1.000000e+00 : f32
    %251 = vector.broadcast %cst_56 : f32 to vector<8x512xf32>
    %252 = arith.addf %251, %250 : vector<8x512xf32>
    %253 = arith.divf %251, %252 : vector<8x512xf32>
    %254 = arith.mulf %248, %253 : vector<8x512xf32>
    %c0_57 = arith.constant 0 : index
    %c0_58 = arith.constant 0 : index
    %c0_59 = arith.constant 0 : index
    %255 = vector.load %arg7[%c0_57, %c0_58, %c0_59] : memref<1x8x512xf32, #tpu.memory_space<vmem>>, vector<1x8x512xf32>
    %256 = vector.shape_cast %255 : vector<1x8x512xf32> to vector<8x512xf32>
    %257 = vector.shape_cast %254 : vector<8x512xf32> to vector<1x8x512xf32>
    tpu.vector_store %arg7[%c0_57, %c0_58, %c0_59], %257 {strides = array<i32>} : memref<1x8x512xf32, #tpu.memory_space<vmem>>, vector<1x8x512xf32>,
    return
  }
  func.func @transform_0(%arg0: i32, %arg1: i32) -> (i32, i32, i32) {
    %c0_i32 = arith.constant 0 : i32
    %c0_i32_0 = arith.constant 0 : i32
    %c0_i32_1 = arith.constant 0 : i32
    return %arg0, %c0_i32, %c0_i32_0 : i32, i32, i32
  }
  func.func @transform_1(%arg0: i32, %arg1: i32) -> (i32, i32) {
    %c0_i32 = arith.constant 0 : i32
    %c0_i32_0 = arith.constant 0 : i32
    %c0_i32_1 = arith.constant 0 : i32
    return %c0_i32, %c0_i32_0 : i32, i32
  }
  func.func @transform_2(%arg0: i32, %arg1: i32) -> (i32, i32) {
    %c0_i32 = arith.constant 0 : i32
    %c0_i32_0 = arith.constant 0 : i32
    %c0_i32_1 = arith.constant 0 : i32
    return %c0_i32, %c0_i32_0 : i32, i32
  }
  func.func @transform_3(%arg0: i32, %arg1: i32) -> (i32, i32) {
    %c0_i32 = arith.constant 0 : i32
    %c0_i32_0 = arith.constant 0 : i32
    %c0_i32_1 = arith.constant 0 : i32
    return %c0_i32, %c0_i32_0 : i32, i32
  }
  func.func @transform_4(%arg0: i32, %arg1: i32) -> (i32, i32) {
    %c0_i32 = arith.constant 0 : i32
    %c0_i32_0 = arith.constant 0 : i32
    %c0_i32_1 = arith.constant 0 : i32
    return %c0_i32, %c0_i32_0 : i32, i32
  }
  func.func @transform_5(%arg0: i32, %arg1: i32) -> (i32, i32, i32) {
    %c0_i32 = arith.constant 0 : i32
    %c0_i32_0 = arith.constant 0 : i32
    return %arg0, %c0_i32, %arg1 : i32, i32, i32
  }
}

</mosaic_0001>

<llo_original>
// kernel: tpu_custom_call.1
$region0: #{tpu_custom_call.1}
  #allocation0 [shape = 'u32[]', space=smem, size = 0x4, offset = 0x4, fixed_abs, tag = 'smem constant byte address 0x4 - core index']
  #allocation1 [shape = 'u32[72,128]{1,0:T(1,128)}', space=vmem, size = 0x9000, scoped, tag = 'internal scratch']
  #allocation2 [shape = 'f32[4,1032]{1,0:T(4,128)}', space=vmem, size = 0x4800, scoped, tag = 'scratch operand']
  %s0 = inlined_call_operand.hbm [shape: f32[2,4,1024], index: 0, kind: input, shape index: {}]
  %s1 = inlined_call_operand.vmem [shape: f32[8,12], index: 1, kind: input, shape index: {}]
  %s2 = inlined_call_operand.vmem [shape: f32[8,1], index: 2, kind: input, shape index: {}]
  %s3 = inlined_call_operand.vmem [shape: f32[8,24], index: 3, kind: input, shape index: {}]
  %s4 = inlined_call_operand.vmem [shape: f32[8,1], index: 4, kind: input, shape index: {}]
  %s5 = inlined_call_operand.hbm [shape: f32[2,8,1024], index: 5, kind: output, shape index: {}]
  %s6 = sld [smem:[#allocation0]]
  $region61: #{tpu_custom_call.1} parent=0
    _
  %s8 = ssub.s32 1, %s6
  %s9 = scalar_select 0, %s8, %s6
  $region1: #{tpu_custom_call.1} parent=0
    #allocation3 [shape = 'u8[32768]{0}', space=vmem, size = 0x8000, scoped, tag = 'input window, operand 0']
    #allocation4 [shape = 's32[2]{0}', space=sflag, size = 0x8, scoped, tag = 'scoped memory for tpu_custom_call.1']
    #allocation5 [shape = 's32[2]{0}', space=sflag, size = 0x8, scoped, tag = 'scoped memory for tpu_custom_call.1']
    #allocation6 [shape = 'u8[32768]{0}', space=vmem, size = 0x8000, scoped, tag = 'output window, operand 0']
    %10 = vsyncpa [#allocation4], 0
    %s11 = scalar_lea.sflag [#allocation4], 1
    %12 = vsyncpa %s11, 0
    %13 = vsyncpa [#allocation5], 0
    %s14 = scalar_lea.sflag [#allocation5], 1
    %15 = vsyncpa %s14, 0
    loop: start=0, step=1, limit=6
    $region2: #{tpu_custom_call.1} parent=1 // loop_pre_header
      _
    $region3: #{tpu_custom_call.1} parent=1 // loop_header
      %s17 = sphi 0, %s21
      %p18 = scmp.ge.s32.totalorder %s17, 6
      %s24 = sphi 0, %s36
      %s25 = sphi 0, %s32
      %s26 = sphi 0, %s24
      %s27 = sphi 0, %s25
      %s28 = sphi 0, %s26
      %s29 = sphi 0, %s27
      %s39 = sphi 0, %s41
      %s42 = sphi 0, %s39
      %s43 = sphi 0, %s42
      %s59 = sphi 0, %s43
      %s63 = sphi 0, %s63
      %s65 = sphi 0, %s63
      %s66 = sphi 0, %s65
      %s80 = sphi 0, %s66
      %s84 = sphi 0, %s84
      %s86 = sphi 0, %s84
      %s87 = sphi 0, %s86
      %s101 = sphi 0, %s87
      %s105 = sphi 0, %s105
      %s107 = sphi 0, %s105
      %s108 = sphi 0, %s107
      %s122 = sphi 0, %s108
      %s126 = sphi 0, %s126
      %s128 = sphi 0, %s126
      %s129 = sphi 0, %s128
      %s143 = sphi 0, %s129
      %s151 = sphi 0, %s153
      %s154 = sphi 0, %s151
      %s155 = sphi 0, %s154
      %s171 = sphi 0, %s155
    $region4: #{tpu_custom_call.1} parent=1 // loop_header_branch
      %20 = sbr.rel (%p18) target = $region8
    $region5: #{tpu_custom_call.1} parent=1 // loop_body
      %s22 = ssub.s32 %s17, 1
      %s23 = ssub.s32 %s17, 2
      %s30 = sadd.s32 1, %s25
      %p31 = scmp.ge.s32.totalorder %s30, 2
      %s32 = scalar_select %p31, 0, %s30
      %s33 = sadd.s32 1, %s24
      %s34 = scalar_select %p31, %s33, %s24
      %p35 = scmp.ge.s32.totalorder %s34, 2
      %s36 = scalar_select %p35, 0, %s34
      %s37 = ssub.s32 %s24, %s36
      %p38 = scmp.eq.s32.totalorder %s37, 0
      %s40 = sadd.s32 %s39, 1
      %s41 = scalar_select %p38, %s39, %s40
      %p44 = pneg %p38
      %p45 = scmp.eq.s32.totalorder %s17, 3
      %p46 = por %p44, %p45
      %p47 = scmp.ne.s32.totalorder %s39, %s42
      %p48 = scmp.eq.s32.totalorder %s17, 0
      %p49 = por %p47, %p48
      %p50 = scmp.ne.s32.totalorder %s39, %s42
      %p51 = scmp.eq.s32.totalorder %s22, 3
      %p52 = por %p50, %p51
      %p53 = scmp.ne.s32.totalorder %s42, %s43
      %p54 = scmp.eq.s32.totalorder %s22, 0
      %p55 = por %p53, %p54
      %p56 = scmp.ne.s32.totalorder %s42, %s43
      %p57 = scmp.eq.s32.totalorder %s23, 3
      %p58 = por %p56, %p57
      %p60 = scmp.ne.s32.totalorder %s43, %s59
      %p61 = scmp.eq.s32.totalorder %s23, 0
      %p62 = por %p60, %p61
      %s64 = sadd.s32 %s63, 1
      %p67 = scmp.eq.s32.totalorder %s17, 3
      %p68 = scmp.ne.s32.totalorder %s63, %s65
      %p69 = scmp.eq.s32.totalorder %s17, 0
      %p70 = por %p68, %p69
      %p71 = scmp.ne.s32.totalorder %s63, %s65
      %p72 = scmp.eq.s32.totalorder %s22, 3
      %p73 = por %p71, %p72
      %p74 = scmp.ne.s32.totalorder %s65, %s66
      %p75 = scmp.eq.s32.totalorder %s22, 0
      %p76 = por %p74, %p75
      %p77 = scmp.ne.s32.totalorder %s65, %s66
      %p78 = scmp.eq.s32.totalorder %s23, 3
      %p79 = por %p77, %p78
      %p81 = scmp.ne.s32.totalorder %s66, %s80
      %p82 = scmp.eq.s32.totalorder %s23, 0
      %p83 = por %p81, %p82
      %s85 = sadd.s32 %s84, 1
      %p88 = scmp.eq.s32.totalorder %s17, 3
      %p89 = scmp.ne.s32.totalorder %s84, %s86
      %p90 = scmp.eq.s32.totalorder %s17, 0
      %p91 = por %p89, %p90
      %p92 = scmp.ne.s32.totalorder %s84, %s86
      %p93 = scmp.eq.s32.totalorder %s22, 3
      %p94 = por %p92, %p93
      %p95 = scmp.ne.s32.totalorder %s86, %s87
      %p96 = scmp.eq.s32.totalorder %s22, 0
      %p97 = por %p95, %p96
      %p98 = scmp.ne.s32.totalorder %s86, %s87
      %p99 = scmp.eq.s32.totalorder %s23, 3
      %p100 = por %p98, %p99
      %p102 = scmp.ne.s32.totalorder %s87, %s101
      %p103 = scmp.eq.s32.totalorder %s23, 0
      %p104 = por %p102, %p103
      %s106 = sadd.s32 %s105, 1
      %p109 = scmp.eq.s32.totalorder %s17, 3
      %p110 = scmp.ne.s32.totalorder %s105, %s107
      %p111 = scmp.eq.s32.totalorder %s17, 0
      %p112 = por %p110, %p111
      %p113 = scmp.ne.s32.totalorder %s105, %s107
      %p114 = scmp.eq.s32.totalorder %s22, 3
      %p115 = por %p113, %p114
      %p116 = scmp.ne.s32.totalorder %s107, %s108
      %p117 = scmp.eq.s32.totalorder %s22, 0
      %p118 = por %p116, %p117
      %p119 = scmp.ne.s32.totalorder %s107, %s108
      %p120 = scmp.eq.s32.totalorder %s23, 3
      %p121 = por %p119, %p120
      %p123 = scmp.ne.s32.totalorder %s108, %s122
      %p124 = scmp.eq.s32.totalorder %s23, 0
      %p125 = por %p123, %p124
      %s127 = sadd.s32 %s126, 1
      %p130 = scmp.eq.s32.totalorder %s17, 3
      %p131 = scmp.ne.s32.totalorder %s126, %s128
      %p132 = scmp.eq.s32.totalorder %s17, 0
      %p133 = por %p131, %p132
      %p134 = scmp.ne.s32.totalorder %s126, %s128
      %p135 = scmp.eq.s32.totalorder %s22, 3
      %p136 = por %p134, %p135
      %p137 = scmp.ne.s32.totalorder %s128, %s129
      %p138 = scmp.eq.s32.totalorder %s22, 0
      %p139 = por %p137, %p138
      %p140 = scmp.ne.s32.totalorder %s128, %s129
      %p141 = scmp.eq.s32.totalorder %s23, 3
      %p142 = por %p140, %p141
      %p144 = scmp.ne.s32.totalorder %s129, %s143
      %p145 = scmp.eq.s32.totalorder %s23, 0
      %p146 = por %p144, %p145
      %s147 = ssub.s32 %s24, %s36
      %s148 = ssub.s32 %s25, %s32
      %s149 = sor.u32 %s147, %s148
      %p150 = scmp.eq.s32.totalorder %s149, 0
      %s152 = sadd.s32 %s151, 1
      %s153 = scalar_select %p150, %s151, %s152
      %p156 = pneg %p150
      %p157 = scmp.eq.s32.totalorder %s17, 3
      %p158 = por %p156, %p157
      %p159 = scmp.ne.s32.totalorder %s151, %s154
      %p160 = scmp.eq.s32.totalorder %s17, 0
      %p161 = por %p159, %p160
      %p162 = scmp.ne.s32.totalorder %s151, %s154
      %p163 = scmp.eq.s32.totalorder %s22, 3
      %p164 = por %p162, %p163
      %p165 = scmp.ne.s32.totalorder %s154, %s155
      %p166 = scmp.eq.s32.totalorder %s22, 0
      %p167 = por %p165, %p166
      %p168 = scmp.ne.s32.totalorder %s154, %s155
      %p169 = scmp.eq.s32.totalorder %s23, 3
      %p170 = por %p168, %p169
      %p172 = scmp.ne.s32.totalorder %s155, %s171
      %p173 = scmp.eq.s32.totalorder %s23, 0
      %p174 = por %p172, %p173
      %p175 = scmp.le.s32.totalorder 1, %s17
      %p176 = scmp.lt.s32.totalorder %s17, 5
      %p177 = pnand %p175, %p176
      %p178 = pneg %p177
      // Predicated region
      $region9: #{tpu_custom_call.1} parent=5 // pred_check
        _
      $region10: #{tpu_custom_call.1} parent=5 // pred_check_branch
        %180 = sbr.rel (%p177) target = $region12
      $region11: #{tpu_custom_call.1} parent=5 // pred_region
        %s181 = ssub.s32 %s17, 1
        // Predicated region
        $region13: #{tpu_custom_call.1} parent=11 // pred_check
          %p182 = pneg %p76
        $region14: #{tpu_custom_call.1} parent=11 // pred_check_branch
          %184 = sbr.rel (%p182) target = $region16
        $region15: #{tpu_custom_call.1} parent=11 // pred_region
          _
        $region16: #{tpu_custom_call.1} parent=11 // pred_fallthru
          _
        // Predicated region
        $region17: #{tpu_custom_call.1} parent=11 // pred_check
          %p185 = pneg %p97
        $region18: #{tpu_custom_call.1} parent=11 // pred_check_branch
          %187 = sbr.rel (%p185) target = $region20
        $region19: #{tpu_custom_call.1} parent=11 // pred_region
          _
        $region20: #{tpu_custom_call.1} parent=11 // pred_fallthru
          _
        // Predicated region
        $region21: #{tpu_custom_call.1} parent=11 // pred_check
          %p188 = pneg %p118
        $region22: #{tpu_custom_call.1} parent=11 // pred_check_branch
          %190 = sbr.rel (%p188) target = $region24
        $region23: #{tpu_custom_call.1} parent=11 // pred_region
          _
        $region24: #{tpu_custom_call.1} parent=11 // pred_fallthru
          _
        // Predicated region
        $region25: #{tpu_custom_call.1} parent=11 // pred_check
          %p191 = pneg %p139
        $region26: #{tpu_custom_call.1} parent=11 // pred_check_branch
          %193 = sbr.rel (%p191) target = $region28
        $region27: #{tpu_custom_call.1} parent=11 // pred_region
          _
        $region28: #{tpu_custom_call.1} parent=11 // pred_fallthru
          _
      $region12: #{tpu_custom_call.1} parent=5 // pred_fallthru
        _
      %p194 = scmp.lt.s32.totalorder %s17, 4
      // Predicated region
      $region29: #{tpu_custom_call.1} parent=5 // pred_check
        %p195 = pneg %p194
      $region30: #{tpu_custom_call.1} parent=5 // pred_check_branch
        %197 = sbr.rel (%p195) target = $region32
      $region31: #{tpu_custom_call.1} parent=5 // pred_region
        // Predicated region
        $region33: #{tpu_custom_call.1} parent=31 // pred_check
          %p198 = pneg %p49
        $region34: #{tpu_custom_call.1} parent=31 // pred_check_branch
          %200 = sbr.rel (%p198) target = $region36
        $region35: #{tpu_custom_call.1} parent=31 // pred_region
          %s201 = sand.u32 %s39, 1
          %s202 = scalar_lea.sflag [#allocation4], %s201
          %s203 = sand.u32 %s39, 1
          %s204 = smul.addr %s203, 32
          %s205 = scalar_lea.vmem [#allocation3], %s204
          %207 = vsyncadd %s202, 0
          %s208 = smul.addr %s24, 8
          %s209 = smul.addr %s208, 4
          %s210 = scalar_lea.hbm %s0, %s209
          %s212 = sshll.u32 %s210, 4
          %s213 = int_to_ptr.hbm [resolvable:$true] %s212
          %s214 = sshll.u32 %s205, 4
          %s215 = int_to_ptr.vmem [resolvable:$true] %s214
          %217 = dma.hbm_to_vmem [thread:$0]  %s213, 512, %s215, %s202
        $region36: #{tpu_custom_call.1} parent=31 // pred_fallthru
          _
      $region32: #{tpu_custom_call.1} parent=5 // pred_fallthru
        _
      %p218 = scmp.le.s32.totalorder 1, %s17
      %p219 = scmp.lt.s32.totalorder %s17, 5
      %p220 = pnand %p218, %p219
      %p221 = pneg %p220
      // Predicated region
      $region37: #{tpu_custom_call.1} parent=5 // pred_check
        _
      $region38: #{tpu_custom_call.1} parent=5 // pred_check_branch
        %223 = sbr.rel (%p220) target = $region40
      $region39: #{tpu_custom_call.1} parent=5 // pred_region
        %s224 = ssub.s32 %s17, 1
        %s225 = sand.u32 %s42, 1
        %s226 = scalar_lea.sflag [#allocation4], %s225
        %s227 = sand.u32 %s42, 1
        %s228 = smul.addr %s227, 32
        %s229 = scalar_lea.vmem [#allocation3], %s228
        // Predicated region
        $region41: #{tpu_custom_call.1} parent=39 // pred_check
          %p230 = pneg %p55
        $region42: #{tpu_custom_call.1} parent=39 // pred_check_branch
          %232 = sbr.rel (%p230) target = $region44
        $region43: #{tpu_custom_call.1} parent=39 // pred_region
          %234 = dma.done %s226, 512
        $region44: #{tpu_custom_call.1} parent=39 // pred_fallthru
          _
        %s235 = sand.u32 %s42, 1
        %s236 = scalar_lea.sflag [#allocation4], %s235
        %s237 = sand.u32 %s42, 1
        %s238 = smul.addr %s237, 32
        %s239 = scalar_lea.vmem [#allocation3], %s238
        %p240 = pneg %p55
        %p241 = pneg %p52
        %p242 = pneg %p76
        %p243 = pneg %p73
        %p244 = pneg %p97
        %p245 = pneg %p94
        %p246 = pneg %p118
        %p247 = pneg %p115
        %p248 = pneg %p139
        %p249 = pneg %p136
        %p250 = pneg %p167
        %p251 = pneg %p164
        %s252 = sand.u32 %s154, 1
        %s253 = scalar_lea.sflag [#allocation5], %s252
        %s254 = sand.u32 %s154, 1
        %s255 = smul.addr %s254, 32
        %s256 = scalar_lea.vmem [#allocation6], %s255
        %s257 = smul.u32 4, %s27
        %p258 = scmp.eq.s32.totalorder %s27, 0
        // Predicated region
        $region45: #{tpu_custom_call.1} parent=39 // pred_check
          %p259 = pneg %p258
        $region46: #{tpu_custom_call.1} parent=39 // pred_check_branch
          %261 = sbr.rel (%p259) target = $region48
        $region47: #{tpu_custom_call.1} parent=39 // pred_region
          %vm262 = vcmask 27648
          %263 = vst.msk [vmem:[#allocation2] sm:$0xf] %vm262, 0.0
          %vm264 = vcmask 60448
          %265 = vst.msk [vmem:[#allocation2 + $0x20] sm:$0xf] %vm264, 0.0
          %v266 = vld [vmem:[%s229] sm:$0xff]
          %v267 = vld [vmem:[%s229 + $0x8] sm:$0xff]
          %v268 = vld [vmem:[%s229 + $0x10] sm:$0xff]
          %v269 = vld [vmem:[%s229 + $0x18] sm:$0xff]
          %274 = vrot.lane.b32.xlu0 %v266, 4
          %v275 = vpop.permute.xlu0 %274
          %276 = vrot.lane.b32.xlu0 %v267, 4
          %v277 = vpop.permute.xlu0 %276
          %278 = vrot.lane.b32.xlu0 %v268, 4
          %v279 = vpop.permute.xlu0 %278
          %280 = vrot.lane.b32.xlu0 %v269, 4
          %v281 = vpop.permute.xlu0 %280
          %v282 = vrot.slane %v275, 4
          %v283 = vrot.slane %v277, 4
          %v284 = vrot.slane %v279, 4
          %v285 = vrot.slane %v281, 4
          %vm286 = vcmask 31744
          %v287 = vsel %vm286, %v282, %v275
          %vm288 = vcmask 1043456
          %v289 = vsel %vm288, %v282, %v283
          %v290 = vsel %vm286, %v289, %v277
          %v291 = vsel %vm288, %v283, %v284
          %v292 = vsel %vm286, %v291, %v279
          %v293 = vsel %vm288, %v284, %v285
          %v294 = vsel %vm286, %v293, %v281
          %vm300 = vcmask 1043488
          %vm301 = vcmask 1047556
          %vm302 = vmor %vm301, %vm300
          %303 = vst.msk [vmem:[#allocation2] sm:$0xff] %vm302, %v287
          %304 = vst [vmem:[#allocation2 + $0x8] sm:$0xff] %v290
          %305 = vst [vmem:[#allocation2 + $0x10] sm:$0xff] %v292
          %306 = vst [vmem:[#allocation2 + $0x18] sm:$0xff] %v294
          %307 = vst.msk [vmem:[#allocation2 + $0x20] sm:$0xf] %vm262, %v285
        $region48: #{tpu_custom_call.1} parent=39 // pred_fallthru
          _
        %s308 = smul.u32 %s27, 512
        %s309 = sshra.s32 %s308, 7
        %s310 = sand.u32 %s308, 127
        %s311 = smul.addr %s309, 4
        %s312 = scalar_lea.vmem [#allocation2], %s311
        %v313 = vld [vmem:[%s312] sm:$0xff]
        %v314 = vld [vmem:[%s312 + $0x8] sm:$0xff]
        %v315 = vld [vmem:[%s312 + $0x10] sm:$0xf]
        %v316 = vld [vmem:[%s2] sm:$0xff]
        %318 = vset.pattern.permute.xlu0 0
        %319 = vperm.xlu0 %318, %v316
        %v320 = vpop.permute.xlu0 %319
        %v322 = vld [vmem:[%s1] sm:$0xff]
        %324 = vset.pattern.permute.xlu0 0
        %325 = vperm.xlu0 %324, %v322
        %v326 = vpop.permute.xlu0 %325
        %v331 = vperm.slane %v313, 0
        %v332 = vperm.slane %v313, 4
        %v333 = vperm.slane %v314, 0
        %v334 = vperm.slane %v314, 4
        %v335 = vperm.slane %v315, 0
        %v341 = vperm.slane %v331, 0
        %v342 = vperm.slane %v332, 0
        %v343 = vperm.slane %v333, 0
        %v344 = vperm.slane %v334, 0
        %v345 = vperm.slane %v335, 0
        %v346 = vmul.f32 %v326, %v341
        %v347 = vmul.f32 %v326, %v342
        %v348 = vmul.f32 %v326, %v343
        %v349 = vmul.f32 %v326, %v344
        %v350 = vmul.f32 %v326, %v345
        %v351 = vadd.f32 %v320, %v346
        %v352 = vadd.f32 %v320, %v347
        %v353 = vadd.f32 %v320, %v348
        %v354 = vadd.f32 %v320, %v349
        %v355 = vadd.f32 %v320, %v350
        %356 = vset.pattern.permute.xlu0 3
        %357 = vperm.xlu0 %356, %v322
        %v358 = vpop.permute.xlu0 %357
        %v360 = vperm.slane %v313, 1
        %v361 = vperm.slane %v313, 5
        %v362 = vperm.slane %v314, 1
        %v363 = vperm.slane %v314, 5
        %v364 = vperm.slane %v315, 1
        %v370 = vperm.slane %v360, 1
        %v371 = vperm.slane %v361, 1
        %v372 = vperm.slane %v362, 1
        %v373 = vperm.slane %v363, 1
        %v374 = vperm.slane %v364, 1
        %v375 = vmul.f32 %v358, %v370
        %v376 = vmul.f32 %v358, %v371
        %v377 = vmul.f32 %v358, %v372
        %v378 = vmul.f32 %v358, %v373
        %v379 = vmul.f32 %v358, %v374
        %v380 = vadd.f32 %v351, %v375
        %v381 = vadd.f32 %v352, %v376
        %v382 = vadd.f32 %v353, %v377
        %v383 = vadd.f32 %v354, %v378
        %v384 = vadd.f32 %v355, %v379
        %385 = vset.pattern.permute.xlu0 6
        %386 = vperm.xlu0 %385, %v322
        %v387 = vpop.permute.xlu0 %386
        %v389 = vperm.slane %v313, 2
        %v390 = vperm.slane %v313, 6
        %v391 = vperm.slane %v314, 2
        %v392 = vperm.slane %v314, 6
        %v393 = vperm.slane %v315, 2
        %v399 = vperm.slane %v389, 2
        %v400 = vperm.slane %v390, 2
        %v401 = vperm.slane %v391, 2
        %v402 = vperm.slane %v392, 2
        %v403 = vperm.slane %v393, 2
        %v404 = vmul.f32 %v387, %v399
        %v405 = vmul.f32 %v387, %v400
        %v406 = vmul.f32 %v387, %v401
        %v407 = vmul.f32 %v387, %v402
        %v408 = vmul.f32 %v387, %v403
        %v409 = vadd.f32 %v380, %v404
        %v410 = vadd.f32 %v381, %v405
        %v411 = vadd.f32 %v382, %v406
        %v412 = vadd.f32 %v383, %v407
        %v413 = vadd.f32 %v384, %v408
        %414 = vset.pattern.permute.xlu0 9
        %415 = vperm.xlu0 %414, %v322
        %v416 = vpop.permute.xlu0 %415
        %v418 = vperm.slane %v313, 3
        %v419 = vperm.slane %v313, 7
        %v420 = vperm.slane %v314, 3
        %v421 = vperm.slane %v314, 7
        %v422 = vperm.slane %v315, 3
        %v428 = vperm.slane %v418, 3
        %v429 = vperm.slane %v419, 3
        %v430 = vperm.slane %v420, 3
        %v431 = vperm.slane %v421, 3
        %v432 = vperm.slane %v422, 3
        %v433 = vmul.f32 %v416, %v428
        %v434 = vmul.f32 %v416, %v429
        %v435 = vmul.f32 %v416, %v430
        %v436 = vmul.f32 %v416, %v431
        %v437 = vmul.f32 %v416, %v432
        %v438 = vadd.f32 %v409, %v433
        %v439 = vadd.f32 %v410, %v434
        %v440 = vadd.f32 %v411, %v435
        %v441 = vadd.f32 %v412, %v436
        %v442 = vadd.f32 %v413, %v437
        %443 = vset.pattern.permute.xlu0 1
        %444 = vperm.xlu0 %443, %v322
        %v445 = vpop.permute.xlu0 %444
        %v447 = vmul.f32 %v445, %v341
        %v448 = vmul.f32 %v445, %v342
        %v449 = vmul.f32 %v445, %v343
        %v450 = vmul.f32 %v445, %v344
        %v451 = vmul.f32 %v445, %v345
        %457 = vrot.lane.b32.xlu0 %v447, 126
        %v458 = vpop.permute.xlu0 %457
        %459 = vrot.lane.b32.xlu0 %v448, 126
        %v460 = vpop.permute.xlu0 %459
        %461 = vrot.lane.b32.xlu0 %v449, 126
        %v462 = vpop.permute.xlu0 %461
        %463 = vrot.lane.b32.xlu0 %v450, 126
        %v464 = vpop.permute.xlu0 %463
        %465 = vrot.lane.b32.xlu0 %v451, 126
        %v466 = vpop.permute.xlu0 %465
        %vm467 = vcmask 1031168
        %v468 = vsel %vm467, %v458, %v460
        %v469 = vsel %vm467, %v460, %v462
        %v470 = vsel %vm467, %v462, %v464
        %v471 = vsel %vm467, %v464, %v466
        %v477 = vadd.f32 %v438, %v468
        %v478 = vadd.f32 %v439, %v469
        %v479 = vadd.f32 %v440, %v470
        %v480 = vadd.f32 %v441, %v471
        %v481 = vadd.f32 %v442, %v466
        %482 = vset.pattern.permute.xlu0 4
        %483 = vperm.xlu0 %482, %v322
        %v484 = vpop.permute.xlu0 %483
        %v486 = vmul.f32 %v484, %v370
        %v487 = vmul.f32 %v484, %v371
        %v488 = vmul.f32 %v484, %v372
        %v489 = vmul.f32 %v484, %v373
        %v490 = vmul.f32 %v484, %v374
        %496 = vrot.lane.b32.xlu0 %v486, 126
        %v497 = vpop.permute.xlu0 %496
        %498 = vrot.lane.b32.xlu0 %v487, 126
        %v499 = vpop.permute.xlu0 %498
        %500 = vrot.lane.b32.xlu0 %v488, 126
        %v501 = vpop.permute.xlu0 %500
        %502 = vrot.lane.b32.xlu0 %v489, 126
        %v503 = vpop.permute.xlu0 %502
        %504 = vrot.lane.b32.xlu0 %v490, 126
        %v505 = vpop.permute.xlu0 %504
        %v506 = vsel %vm467, %v497, %v499
        %v507 = vsel %vm467, %v499, %v501
        %v508 = vsel %vm467, %v501, %v503
        %v509 = vsel %vm467, %v503, %v505
        %v515 = vadd.f32 %v477, %v506
        %v516 = vadd.f32 %v478, %v507
        %v517 = vadd.f32 %v479, %v508
        %v518 = vadd.f32 %v480, %v509
        %v519 = vadd.f32 %v481, %v505
        %520 = vset.pattern.permute.xlu0 7
        %521 = vperm.xlu0 %520, %v322
        %v522 = vpop.permute.xlu0 %521
        %v524 = vmul.f32 %v522, %v399
        %v525 = vmul.f32 %v522, %v400
        %v526 = vmul.f32 %v522, %v401
        %v527 = vmul.f32 %v522, %v402
        %v528 = vmul.f32 %v522, %v403
        %534 = vrot.lane.b32.xlu0 %v524, 126
        %v535 = vpop.permute.xlu0 %534
        %536 = vrot.lane.b32.xlu0 %v525, 126
        %v537 = vpop.permute.xlu0 %536
        %538 = vrot.lane.b32.xlu0 %v526, 126
        %v539 = vpop.permute.xlu0 %538
        %540 = vrot.lane.b32.xlu0 %v527, 126
        %v541 = vpop.permute.xlu0 %540
        %542 = vrot.lane.b32.xlu0 %v528, 126
        %v543 = vpop.permute.xlu0 %542
        %v544 = vsel %vm467, %v535, %v537
        %v545 = vsel %vm467, %v537, %v539
        %v546 = vsel %vm467, %v539, %v541
        %v547 = vsel %vm467, %v541, %v543
        %v553 = vadd.f32 %v515, %v544
        %v554 = vadd.f32 %v516, %v545
        %v555 = vadd.f32 %v517, %v546
        %v556 = vadd.f32 %v518, %v547
        %v557 = vadd.f32 %v519, %v543
        %558 = vset.pattern.permute.xlu0 10
        %559 = vperm.xlu0 %558, %v322
        %v560 = vpop.permute.xlu0 %559
        %v562 = vmul.f32 %v560, %v428
        %v563 = vmul.f32 %v560, %v429
        %v564 = vmul.f32 %v560, %v430
        %v565 = vmul.f32 %v560, %v431
        %v566 = vmul.f32 %v560, %v432
        %572 = vrot.lane.b32.xlu0 %v562, 126
        %v573 = vpop.permute.xlu0 %572
        %574 = vrot.lane.b32.xlu0 %v563, 126
        %v575 = vpop.permute.xlu0 %574
        %576 = vrot.lane.b32.xlu0 %v564, 126
        %v577 = vpop.permute.xlu0 %576
        %578 = vrot.lane.b32.xlu0 %v565, 126
        %v579 = vpop.permute.xlu0 %578
        %580 = vrot.lane.b32.xlu0 %v566, 126
        %v581 = vpop.permute.xlu0 %580
        %v582 = vsel %vm467, %v573, %v575
        %v583 = vsel %vm467, %v575, %v577
        %v584 = vsel %vm467, %v577, %v579
        %v585 = vsel %vm467, %v579, %v581
        %v591 = vadd.f32 %v553, %v582
        %v592 = vadd.f32 %v554, %v583
        %v593 = vadd.f32 %v555, %v584
        %v594 = vadd.f32 %v556, %v585
        %v595 = vadd.f32 %v557, %v581
        %596 = vset.pattern.permute.xlu0 2
        %597 = vperm.xlu0 %596, %v322
        %v598 = vpop.permute.xlu0 %597
        %v600 = vmul.f32 %v598, %v341
        %v601 = vmul.f32 %v598, %v342
        %v602 = vmul.f32 %v598, %v343
        %v603 = vmul.f32 %v598, %v344
        %v604 = vmul.f32 %v598, %v345
        %610 = vrot.lane.b32.xlu0 %v600, 124
        %v611 = vpop.permute.xlu0 %610
        %612 = vrot.lane.b32.xlu0 %v601, 124
        %v613 = vpop.permute.xlu0 %612
        %614 = vrot.lane.b32.xlu0 %v602, 124
        %v615 = vpop.permute.xlu0 %614
        %616 = vrot.lane.b32.xlu0 %v603, 124
        %v617 = vpop.permute.xlu0 %616
        %618 = vrot.lane.b32.xlu0 %v604, 124
        %v619 = vpop.permute.xlu0 %618
        %vm620 = vcmask 1014784
        %v621 = vsel %vm620, %v611, %v613
        %v622 = vsel %vm620, %v613, %v615
        %v623 = vsel %vm620, %v615, %v617
        %v624 = vsel %vm620, %v617, %v619
        %v630 = vadd.f32 %v591, %v621
        %v631 = vadd.f32 %v592, %v622
        %v632 = vadd.f32 %v593, %v623
        %v633 = vadd.f32 %v594, %v624
        %v634 = vadd.f32 %v595, %v619
        %635 = vset.pattern.permute.xlu0 5
        %636 = vperm.xlu0 %635, %v322
        %v637 = vpop.permute.xlu0 %636
        %v639 = vmul.f32 %v637, %v370
        %v640 = vmul.f32 %v637, %v371
        %v641 = vmul.f32 %v637, %v372
        %v642 = vmul.f32 %v637, %v373
        %v643 = vmul.f32 %v637, %v374
        %649 = vrot.lane.b32.xlu0 %v639, 124
        %v650 = vpop.permute.xlu0 %649
        %651 = vrot.lane.b32.xlu0 %v640, 124
        %v652 = vpop.permute.xlu0 %651
        %653 = vrot.lane.b32.xlu0 %v641, 124
        %v654 = vpop.permute.xlu0 %653
        %655 = vrot.lane.b32.xlu0 %v642, 124
        %v656 = vpop.permute.xlu0 %655
        %657 = vrot.lane.b32.xlu0 %v643, 124
        %v658 = vpop.permute.xlu0 %657
        %v659 = vsel %vm620, %v650, %v652
        %v660 = vsel %vm620, %v652, %v654
        %v661 = vsel %vm620, %v654, %v656
        %v662 = vsel %vm620, %v656, %v658
        %v668 = vadd.f32 %v630, %v659
        %v669 = vadd.f32 %v631, %v660
        %v670 = vadd.f32 %v632, %v661
        %v671 = vadd.f32 %v633, %v662
        %v672 = vadd.f32 %v634, %v658
        %673 = vset.pattern.permute.xlu0 8
        %674 = vperm.xlu0 %673, %v322
        %v675 = vpop.permute.xlu0 %674
        %v677 = vmul.f32 %v675, %v399
        %v678 = vmul.f32 %v675, %v400
        %v679 = vmul.f32 %v675, %v401
        %v680 = vmul.f32 %v675, %v402
        %v681 = vmul.f32 %v675, %v403
        %687 = vrot.lane.b32.xlu0 %v677, 124
        %v688 = vpop.permute.xlu0 %687
        %689 = vrot.lane.b32.xlu0 %v678, 124
        %v690 = vpop.permute.xlu0 %689
        %691 = vrot.lane.b32.xlu0 %v679, 124
        %v692 = vpop.permute.xlu0 %691
        %693 = vrot.lane.b32.xlu0 %v680, 124
        %v694 = vpop.permute.xlu0 %693
        %695 = vrot.lane.b32.xlu0 %v681, 124
        %v696 = vpop.permute.xlu0 %695
        %v697 = vsel %vm620, %v688, %v690
        %v698 = vsel %vm620, %v690, %v692
        %v699 = vsel %vm620, %v692, %v694
        %v700 = vsel %vm620, %v694, %v696
        %v706 = vadd.f32 %v668, %v697
        %v707 = vadd.f32 %v669, %v698
        %v708 = vadd.f32 %v670, %v699
        %v709 = vadd.f32 %v671, %v700
        %v710 = vadd.f32 %v672, %v696
        %711 = vset.pattern.permute.xlu0 11
        %712 = vperm.xlu0 %711, %v322
        %v713 = vpop.permute.xlu0 %712
        %v715 = vmul.f32 %v713, %v428
        %v716 = vmul.f32 %v713, %v429
        %v717 = vmul.f32 %v713, %v430
        %v718 = vmul.f32 %v713, %v431
        %v719 = vmul.f32 %v713, %v432
        %725 = vrot.lane.b32.xlu0 %v715, 124
        %v726 = vpop.permute.xlu0 %725
        %727 = vrot.lane.b32.xlu0 %v716, 124
        %v728 = vpop.permute.xlu0 %727
        %729 = vrot.lane.b32.xlu0 %v717, 124
        %v730 = vpop.permute.xlu0 %729
        %731 = vrot.lane.b32.xlu0 %v718, 124
        %v732 = vpop.permute.xlu0 %731
        %733 = vrot.lane.b32.xlu0 %v719, 124
        %v734 = vpop.permute.xlu0 %733
        %v735 = vsel %vm620, %v726, %v728
        %v736 = vsel %vm620, %v728, %v730
        %v737 = vsel %vm620, %v730, %v732
        %v738 = vsel %vm620, %v732, %v734
        %v744 = vadd.f32 %v706, %v735
        %v745 = vadd.f32 %v707, %v736
        %v746 = vadd.f32 %v708, %v737
        %v747 = vadd.f32 %v709, %v738
        %v748 = vadd.f32 %v710, %v734
        %s749 = ssub.s32 %s308, 2
        %v750 = vlaneseq
        %v751 = vand.u32 %v750, 127
        %v752 = vadd.s32 %v751, 128
        %v753 = vadd.s32 %v751, 256
        %v754 = vadd.s32 %v751, 384
        %v755 = vadd.s32 %v751, 512
        %v756 = vstv %s749
        %v757 = vadd.s32 %v756, %v751
        %v758 = vadd.s32 %v756, %v752
        %v759 = vadd.s32 %v756, %v753
        %v760 = vadd.s32 %v756, %v754
        %v761 = vadd.s32 %v756, %v755
        %vm762 = vcmp.ge.s32.totalorder %v757, 0
        %vm763 = vcmp.ge.s32.totalorder %v758, 0
        %vm764 = vcmp.ge.s32.totalorder %v759, 0
        %vm765 = vcmp.ge.s32.totalorder %v760, 0
        %vm766 = vcmp.ge.s32.totalorder %v761, 0
        %vm767 = vcmp.lt.s32.totalorder %v757, 1024
        %vm768 = vcmp.lt.s32.totalorder %v758, 1024
        %vm769 = vcmp.lt.s32.totalorder %v759, 1024
        %vm770 = vcmp.lt.s32.totalorder %v760, 1024
        %vm771 = vcmp.lt.s32.totalorder %v761, 1024
        %vm772 = vmand %vm762, %vm767
        %vm773 = vmand %vm763, %vm768
        %vm774 = vmand %vm764, %vm769
        %vm775 = vmand %vm765, %vm770
        %vm776 = vmand %vm766, %vm771
        %v777 = vsel %vm772, 1, 0
        %v778 = vsel %vm773, 1, 0
        %v779 = vsel %vm774, 1, 0
        %v780 = vsel %vm775, 1, 0
        %v781 = vsel %vm776, 1, 0
        %vm782 = vcmp.eq.s32.totalorder %v777, 1
        %vm783 = vcmp.eq.s32.totalorder %v778, 1
        %vm784 = vcmp.eq.s32.totalorder %v779, 1
        %vm785 = vcmp.eq.s32.totalorder %v780, 1
        %vm786 = vcmp.eq.s32.totalorder %v781, 1
        %v787 = vsel %vm782, %v744, 0.0
        %v788 = vsel %vm783, %v745, 0.0
        %v789 = vsel %vm784, %v746, 0.0
        %v790 = vsel %vm785, %v747, 0.0
        %v791 = vsel %vm786, %v748, 0.0
        %v792 = vld [vmem:[%s4] sm:$0xff]
        %794 = vset.pattern.permute.xlu0 0
        %795 = vperm.xlu0 %794, %v792
        %v796 = vpop.permute.xlu0 %795
        %v798 = vld [vmem:[%s3] sm:$0xff]
        %800 = vset.pattern.permute.xlu0 0
        %801 = vperm.xlu0 %800, %v798
        %v802 = vpop.permute.xlu0 %801
        %v804 = vperm.slane %v787, 0
        %v805 = vperm.slane %v788, 0
        %v806 = vperm.slane %v789, 0
        %v807 = vperm.slane %v790, 0
        %v808 = vmul.f32 %v802, %v804
        %v809 = vmul.f32 %v802, %v805
        %v810 = vmul.f32 %v802, %v806
        %v811 = vmul.f32 %v802, %v807
        %v812 = vadd.f32 %v796, %v808
        %v813 = vadd.f32 %v796, %v809
        %v814 = vadd.f32 %v796, %v810
        %v815 = vadd.f32 %v796, %v811
        %816 = vset.pattern.permute.xlu0 3
        %817 = vperm.xlu0 %816, %v798
        %v818 = vpop.permute.xlu0 %817
        %v820 = vperm.slane %v787, 1
        %v821 = vperm.slane %v788, 1
        %v822 = vperm.slane %v789, 1
        %v823 = vperm.slane %v790, 1
        %v824 = vmul.f32 %v818, %v820
        %v825 = vmul.f32 %v818, %v821
        %v826 = vmul.f32 %v818, %v822
        %v827 = vmul.f32 %v818, %v823
        %v828 = vadd.f32 %v812, %v824
        %v829 = vadd.f32 %v813, %v825
        %v830 = vadd.f32 %v814, %v826
        %v831 = vadd.f32 %v815, %v827
        %832 = vset.pattern.permute.xlu0 6
        %833 = vperm.xlu0 %832, %v798
        %v834 = vpop.permute.xlu0 %833
        %v836 = vperm.slane %v787, 2
        %v837 = vperm.slane %v788, 2
        %v838 = vperm.slane %v789, 2
        %v839 = vperm.slane %v790, 2
        %v840 = vmul.f32 %v834, %v836
        %v841 = vmul.f32 %v834, %v837
        %v842 = vmul.f32 %v834, %v838
        %v843 = vmul.f32 %v834, %v839
        %v844 = vadd.f32 %v828, %v840
        %v845 = vadd.f32 %v829, %v841
        %v846 = vadd.f32 %v830, %v842
        %v847 = vadd.f32 %v831, %v843
        %848 = vset.pattern.permute.xlu0 9
        %849 = vperm.xlu0 %848, %v798
        %v850 = vpop.permute.xlu0 %849
        %v852 = vperm.slane %v787, 3
        %v853 = vperm.slane %v788, 3
        %v854 = vperm.slane %v789, 3
        %v855 = vperm.slane %v790, 3
        %v856 = vmul.f32 %v850, %v852
        %v857 = vmul.f32 %v850, %v853
        %v858 = vmul.f32 %v850, %v854
        %v859 = vmul.f32 %v850, %v855
        %v860 = vadd.f32 %v844, %v856
        %v861 = vadd.f32 %v845, %v857
        %v862 = vadd.f32 %v846, %v858
        %v863 = vadd.f32 %v847, %v859
        %864 = vset.pattern.permute.xlu0 12
        %865 = vperm.xlu0 %864, %v798
        %v866 = vpop.permute.xlu0 %865
        %v868 = vperm.slane %v787, 4
        %v869 = vperm.slane %v788, 4
        %v870 = vperm.slane %v789, 4
        %v871 = vperm.slane %v790, 4
        %v872 = vmul.f32 %v866, %v868
        %v873 = vmul.f32 %v866, %v869
        %v874 = vmul.f32 %v866, %v870
        %v875 = vmul.f32 %v866, %v871
        %v876 = vadd.f32 %v860, %v872
        %v877 = vadd.f32 %v861, %v873
        %v878 = vadd.f32 %v862, %v874
        %v879 = vadd.f32 %v863, %v875
        %880 = vset.pattern.permute.xlu0 15
        %881 = vperm.xlu0 %880, %v798
        %v882 = vpop.permute.xlu0 %881
        %v884 = vperm.slane %v787, 5
        %v885 = vperm.slane %v788, 5
        %v886 = vperm.slane %v789, 5
        %v887 = vperm.slane %v790, 5
        %v888 = vmul.f32 %v882, %v884
        %v889 = vmul.f32 %v882, %v885
        %v890 = vmul.f32 %v882, %v886
        %v891 = vmul.f32 %v882, %v887
        %v892 = vadd.f32 %v876, %v888
        %v893 = vadd.f32 %v877, %v889
        %v894 = vadd.f32 %v878, %v890
        %v895 = vadd.f32 %v879, %v891
        %896 = vset.pattern.permute.xlu0 18
        %897 = vperm.xlu0 %896, %v798
        %v898 = vpop.permute.xlu0 %897
        %v900 = vperm.slane %v787, 6
        %v901 = vperm.slane %v788, 6
        %v902 = vperm.slane %v789, 6
        %v903 = vperm.slane %v790, 6
        %v904 = vmul.f32 %v898, %v900
        %v905 = vmul.f32 %v898, %v901
        %v906 = vmul.f32 %v898, %v902
        %v907 = vmul.f32 %v898, %v903
        %v908 = vadd.f32 %v892, %v904
        %v909 = vadd.f32 %v893, %v905
        %v910 = vadd.f32 %v894, %v906
        %v911 = vadd.f32 %v895, %v907
        %912 = vset.pattern.permute.xlu0 21
        %913 = vperm.xlu0 %912, %v798
        %v914 = vpop.permute.xlu0 %913
        %v916 = vperm.slane %v787, 7
        %v917 = vperm.slane %v788, 7
        %v918 = vperm.slane %v789, 7
        %v919 = vperm.slane %v790, 7
        %v920 = vmul.f32 %v914, %v916
        %v921 = vmul.f32 %v914, %v917
        %v922 = vmul.f32 %v914, %v918
        %v923 = vmul.f32 %v914, %v919
        %v924 = vadd.f32 %v908, %v920
        %v925 = vadd.f32 %v909, %v921
        %v926 = vadd.f32 %v910, %v922
        %v927 = vadd.f32 %v911, %v923
        %928 = vset.pattern.permute.xlu0 1
        %929 = vperm.xlu0 %928, %v798
        %v930 = vpop.permute.xlu0 %929
        %v932 = vperm.slane %v791, 0
        %v933 = vmul.f32 %v930, %v804
        %v934 = vmul.f32 %v930, %v805
        %v935 = vmul.f32 %v930, %v806
        %v936 = vmul.f32 %v930, %v807
        %v937 = vmul.f32 %v930, %v932
        %943 = vrot.lane.b32.xlu0 %v933, 126
        %v944 = vpop.permute.xlu0 %943
        %945 = vrot.lane.b32.xlu0 %v934, 126
        %v946 = vpop.permute.xlu0 %945
        %947 = vrot.lane.b32.xlu0 %v935, 126
        %v948 = vpop.permute.xlu0 %947
        %949 = vrot.lane.b32.xlu0 %v936, 126
        %v950 = vpop.permute.xlu0 %949
        %951 = vrot.lane.b32.xlu0 %v937, 126
        %v952 = vpop.permute.xlu0 %951
        %v953 = vsel %vm467, %v944, %v946
        %v954 = vsel %vm467, %v946, %v948
        %v955 = vsel %vm467, %v948, %v950
        %v956 = vsel %vm467, %v950, %v952
        %v961 = vadd.f32 %v924, %v953
        %v962 = vadd.f32 %v925, %v954
        %v963 = vadd.f32 %v926, %v955
        %v964 = vadd.f32 %v927, %v956
        %965 = vset.pattern.permute.xlu0 4
        %966 = vperm.xlu0 %965, %v798
        %v967 = vpop.permute.xlu0 %966
        %v969 = vperm.slane %v791, 1
        %v970 = vmul.f32 %v967, %v820
        %v971 = vmul.f32 %v967, %v821
        %v972 = vmul.f32 %v967, %v822
        %v973 = vmul.f32 %v967, %v823
        %v974 = vmul.f32 %v967, %v969
        %980 = vrot.lane.b32.xlu0 %v970, 126
        %v981 = vpop.permute.xlu0 %980
        %982 = vrot.lane.b32.xlu0 %v971, 126
        %v983 = vpop.permute.xlu0 %982
        %984 = vrot.lane.b32.xlu0 %v972, 126
        %v985 = vpop.permute.xlu0 %984
        %986 = vrot.lane.b32.xlu0 %v973, 126
        %v987 = vpop.permute.xlu0 %986
        %988 = vrot.lane.b32.xlu0 %v974, 126
        %v989 = vpop.permute.xlu0 %988
        %v990 = vsel %vm467, %v981, %v983
        %v991 = vsel %vm467, %v983, %v985
        %v992 = vsel %vm467, %v985, %v987
        %v993 = vsel %vm467, %v987, %v989
        %v998 = vadd.f32 %v961, %v990
        %v999 = vadd.f32 %v962, %v991
        %v1000 = vadd.f32 %v963, %v992
        %v1001 = vadd.f32 %v964, %v993
        %1002 = vset.pattern.permute.xlu0 7
        %1003 = vperm.xlu0 %1002, %v798
        %v1004 = vpop.permute.xlu0 %1003
        %v1006 = vperm.slane %v791, 2
        %v1007 = vmul.f32 %v1004, %v836
        %v1008 = vmul.f32 %v1004, %v837
        %v1009 = vmul.f32 %v1004, %v838
        %v1010 = vmul.f32 %v1004, %v839
        %v1011 = vmul.f32 %v1004, %v1006
        %1017 = vrot.lane.b32.xlu0 %v1007, 126
        %v1018 = vpop.permute.xlu0 %1017
        %1019 = vrot.lane.b32.xlu0 %v1008, 126
        %v1020 = vpop.permute.xlu0 %1019
        %1021 = vrot.lane.b32.xlu0 %v1009, 126
        %v1022 = vpop.permute.xlu0 %1021
        %1023 = vrot.lane.b32.xlu0 %v1010, 126
        %v1024 = vpop.permute.xlu0 %1023
        %1025 = vrot.lane.b32.xlu0 %v1011, 126
        %v1026 = vpop.permute.xlu0 %1025
        %v1027 = vsel %vm467, %v1018, %v1020
        %v1028 = vsel %vm467, %v1020, %v1022
        %v1029 = vsel %vm467, %v1022, %v1024
        %v1030 = vsel %vm467, %v1024, %v1026
        %v1035 = vadd.f32 %v998, %v1027
        %v1036 = vadd.f32 %v999, %v1028
        %v1037 = vadd.f32 %v1000, %v1029
        %v1038 = vadd.f32 %v1001, %v1030
        %1039 = vset.pattern.permute.xlu0 10
        %1040 = vperm.xlu0 %1039, %v798
        %v1041 = vpop.permute.xlu0 %1040
        %v1043 = vperm.slane %v791, 3
        %v1044 = vmul.f32 %v1041, %v852
        %v1045 = vmul.f32 %v1041, %v853
        %v1046 = vmul.f32 %v1041, %v854
        %v1047 = vmul.f32 %v1041, %v855
        %v1048 = vmul.f32 %v1041, %v1043
        %1054 = vrot.lane.b32.xlu0 %v1044, 126
        %v1055 = vpop.permute.xlu0 %1054
        %1056 = vrot.lane.b32.xlu0 %v1045, 126
        %v1057 = vpop.permute.xlu0 %1056
        %1058 = vrot.lane.b32.xlu0 %v1046, 126
        %v1059 = vpop.permute.xlu0 %1058
        %1060 = vrot.lane.b32.xlu0 %v1047, 126
        %v1061 = vpop.permute.xlu0 %1060
        %1062 = vrot.lane.b32.xlu0 %v1048, 126
        %v1063 = vpop.permute.xlu0 %1062
        %v1064 = vsel %vm467, %v1055, %v1057
        %v1065 = vsel %vm467, %v1057, %v1059
        %v1066 = vsel %vm467, %v1059, %v1061
        %v1067 = vsel %vm467, %v1061, %v1063
        %v1072 = vadd.f32 %v1035, %v1064
        %v1073 = vadd.f32 %v1036, %v1065
        %v1074 = vadd.f32 %v1037, %v1066
        %v1075 = vadd.f32 %v1038, %v1067
        %1076 = vset.pattern.permute.xlu0 13
        %1077 = vperm.xlu0 %1076, %v798
        %v1078 = vpop.permute.xlu0 %1077
        %v1080 = vperm.slane %v791, 4
        %v1081 = vmul.f32 %v1078, %v868
        %v1082 = vmul.f32 %v1078, %v869
        %v1083 = vmul.f32 %v1078, %v870
        %v1084 = vmul.f32 %v1078, %v871
        %v1085 = vmul.f32 %v1078, %v1080
        %1091 = vrot.lane.b32.xlu0 %v1081, 126
        %v1092 = vpop.permute.xlu0 %1091
        %1093 = vrot.lane.b32.xlu0 %v1082, 126
        %v1094 = vpop.permute.xlu0 %1093
        %1095 = vrot.lane.b32.xlu0 %v1083, 126
        %v1096 = vpop.permute.xlu0 %1095
        %1097 = vrot.lane.b32.xlu0 %v1084, 126
        %v1098 = vpop.permute.xlu0 %1097
        %1099 = vrot.lane.b32.xlu0 %v1085, 126
        %v1100 = vpop.permute.xlu0 %1099
        %v1101 = vsel %vm467, %v1092, %v1094
        %v1102 = vsel %vm467, %v1094, %v1096
        %v1103 = vsel %vm467, %v1096, %v1098
        %v1104 = vsel %vm467, %v1098, %v1100
        %v1109 = vadd.f32 %v1072, %v1101
        %v1110 = vadd.f32 %v1073, %v1102
        %v1111 = vadd.f32 %v1074, %v1103
        %v1112 = vadd.f32 %v1075, %v1104
        %1113 = vset.pattern.permute.xlu0 16
        %1114 = vperm.xlu0 %1113, %v798
        %v1115 = vpop.permute.xlu0 %1114
        %v1117 = vperm.slane %v791, 5
        %v1118 = vmul.f32 %v1115, %v884
        %v1119 = vmul.f32 %v1115, %v885
        %v1120 = vmul.f32 %v1115, %v886
        %v1121 = vmul.f32 %v1115, %v887
        %v1122 = vmul.f32 %v1115, %v1117
        %1128 = vrot.lane.b32.xlu0 %v1118, 126
        %v1129 = vpop.permute.xlu0 %1128
        %1130 = vrot.lane.b32.xlu0 %v1119, 126
        %v1131 = vpop.permute.xlu0 %1130
        %1132 = vrot.lane.b32.xlu0 %v1120, 126
        %v1133 = vpop.permute.xlu0 %1132
        %1134 = vrot.lane.b32.xlu0 %v1121, 126
        %v1135 = vpop.permute.xlu0 %1134
        %1136 = vrot.lane.b32.xlu0 %v1122, 126
        %v1137 = vpop.permute.xlu0 %1136
        %v1138 = vsel %vm467, %v1129, %v1131
        %v1139 = vsel %vm467, %v1131, %v1133
        %v1140 = vsel %vm467, %v1133, %v1135
        %v1141 = vsel %vm467, %v1135, %v1137
        %v1146 = vadd.f32 %v1109, %v1138
        %v1147 = vadd.f32 %v1110, %v1139
        %v1148 = vadd.f32 %v1111, %v1140
        %v1149 = vadd.f32 %v1112, %v1141
        %1150 = vset.pattern.permute.xlu0 19
        %1151 = vperm.xlu0 %1150, %v798
        %v1152 = vpop.permute.xlu0 %1151
        %v1154 = vperm.slane %v791, 6
        %v1155 = vmul.f32 %v1152, %v900
        %v1156 = vmul.f32 %v1152, %v901
        %v1157 = vmul.f32 %v1152, %v902
        %v1158 = vmul.f32 %v1152, %v903
        %v1159 = vmul.f32 %v1152, %v1154
        %1165 = vrot.lane.b32.xlu0 %v1155, 126
        %v1166 = vpop.permute.xlu0 %1165
        %1167 = vrot.lane.b32.xlu0 %v1156, 126
        %v1168 = vpop.permute.xlu0 %1167
        %1169 = vrot.lane.b32.xlu0 %v1157, 126
        %v1170 = vpop.permute.xlu0 %1169
        %1171 = vrot.lane.b32.xlu0 %v1158, 126
        %v1172 = vpop.permute.xlu0 %1171
        %1173 = vrot.lane.b32.xlu0 %v1159, 126
        %v1174 = vpop.permute.xlu0 %1173
        %v1175 = vsel %vm467, %v1166, %v1168
        %v1176 = vsel %vm467, %v1168, %v1170
        %v1177 = vsel %vm467, %v1170, %v1172
        %v1178 = vsel %vm467, %v1172, %v1174
        %v1183 = vadd.f32 %v1146, %v1175
        %v1184 = vadd.f32 %v1147, %v1176
        %v1185 = vadd.f32 %v1148, %v1177
        %v1186 = vadd.f32 %v1149, %v1178
        %1187 = vset.pattern.permute.xlu0 22
        %1188 = vperm.xlu0 %1187, %v798
        %v1189 = vpop.permute.xlu0 %1188
        %v1191 = vperm.slane %v791, 7
        %v1192 = vmul.f32 %v1189, %v916
        %v1193 = vmul.f32 %v1189, %v917
        %v1194 = vmul.f32 %v1189, %v918
        %v1195 = vmul.f32 %v1189, %v919
        %v1196 = vmul.f32 %v1189, %v1191
        %1202 = vrot.lane.b32.xlu0 %v1192, 126
        %v1203 = vpop.permute.xlu0 %1202
        %1204 = vrot.lane.b32.xlu0 %v1193, 126
        %v1205 = vpop.permute.xlu0 %1204
        %1206 = vrot.lane.b32.xlu0 %v1194, 126
        %v1207 = vpop.permute.xlu0 %1206
        %1208 = vrot.lane.b32.xlu0 %v1195, 126
        %v1209 = vpop.permute.xlu0 %1208
        %1210 = vrot.lane.b32.xlu0 %v1196, 126
        %v1211 = vpop.permute.xlu0 %1210
        %v1212 = vsel %vm467, %v1203, %v1205
        %v1213 = vsel %vm467, %v1205, %v1207
        %v1214 = vsel %vm467, %v1207, %v1209
        %v1215 = vsel %vm467, %v1209, %v1211
        %v1220 = vadd.f32 %v1183, %v1212
        %v1221 = vadd.f32 %v1184, %v1213
        %v1222 = vadd.f32 %v1185, %v1214
        %v1223 = vadd.f32 %v1186, %v1215
        %1224 = vset.pattern.permute.xlu0 2
        %1225 = vperm.xlu0 %1224, %v798
        %v1226 = vpop.permute.xlu0 %1225
        %v1228 = vmul.f32 %v1226, %v804
        %v1229 = vmul.f32 %v1226, %v805
        %v1230 = vmul.f32 %v1226, %v806
        %v1231 = vmul.f32 %v1226, %v807
        %v1232 = vmul.f32 %v1226, %v932
        %1238 = vrot.lane.b32.xlu0 %v1228, 124
        %v1239 = vpop.permute.xlu0 %1238
        %1240 = vrot.lane.b32.xlu0 %v1229, 124
        %v1241 = vpop.permute.xlu0 %1240
        %1242 = vrot.lane.b32.xlu0 %v1230, 124
        %v1243 = vpop.permute.xlu0 %1242
        %1244 = vrot.lane.b32.xlu0 %v1231, 124
        %v1245 = vpop.permute.xlu0 %1244
        %1246 = vrot.lane.b32.xlu0 %v1232, 124
        %v1247 = vpop.permute.xlu0 %1246
        %v1248 = vsel %vm620, %v1239, %v1241
        %v1249 = vsel %vm620, %v1241, %v1243
        %v1250 = vsel %vm620, %v1243, %v1245
        %v1251 = vsel %vm620, %v1245, %v1247
        %v1256 = vadd.f32 %v1220, %v1248
        %v1257 = vadd.f32 %v1221, %v1249
        %v1258 = vadd.f32 %v1222, %v1250
        %v1259 = vadd.f32 %v1223, %v1251
        %1260 = vset.pattern.permute.xlu0 5
        %1261 = vperm.xlu0 %1260, %v798
        %v1262 = vpop.permute.xlu0 %1261
        %v1264 = vmul.f32 %v1262, %v820
        %v1265 = vmul.f32 %v1262, %v821
        %v1266 = vmul.f32 %v1262, %v822
        %v1267 = vmul.f32 %v1262, %v823
        %v1268 = vmul.f32 %v1262, %v969
        %1274 = vrot.lane.b32.xlu0 %v1264, 124
        %v1275 = vpop.permute.xlu0 %1274
        %1276 = vrot.lane.b32.xlu0 %v1265, 124
        %v1277 = vpop.permute.xlu0 %1276
        %1278 = vrot.lane.b32.xlu0 %v1266, 124
        %v1279 = vpop.permute.xlu0 %1278
        %1280 = vrot.lane.b32.xlu0 %v1267, 124
        %v1281 = vpop.permute.xlu0 %1280
        %1282 = vrot.lane.b32.xlu0 %v1268, 124
        %v1283 = vpop.permute.xlu0 %1282
        %v1284 = vsel %vm620, %v1275, %v1277
        %v1285 = vsel %vm620, %v1277, %v1279
        %v1286 = vsel %vm620, %v1279, %v1281
        %v1287 = vsel %vm620, %v1281, %v1283
        %v1292 = vadd.f32 %v1256, %v1284
        %v1293 = vadd.f32 %v1257, %v1285
        %v1294 = vadd.f32 %v1258, %v1286
        %v1295 = vadd.f32 %v1259, %v1287
        %1296 = vset.pattern.permute.xlu0 8
        %1297 = vperm.xlu0 %1296, %v798
        %v1298 = vpop.permute.xlu0 %1297
        %v1300 = vmul.f32 %v1298, %v836
        %v1301 = vmul.f32 %v1298, %v837
        %v1302 = vmul.f32 %v1298, %v838
        %v1303 = vmul.f32 %v1298, %v839
        %v1304 = vmul.f32 %v1298, %v1006
        %1310 = vrot.lane.b32.xlu0 %v1300, 124
        %v1311 = vpop.permute.xlu0 %1310
        %1312 = vrot.lane.b32.xlu0 %v1301, 124
        %v1313 = vpop.permute.xlu0 %1312
        %1314 = vrot.lane.b32.xlu0 %v1302, 124
        %v1315 = vpop.permute.xlu0 %1314
        %1316 = vrot.lane.b32.xlu0 %v1303, 124
        %v1317 = vpop.permute.xlu0 %1316
        %1318 = vrot.lane.b32.xlu0 %v1304, 124
        %v1319 = vpop.permute.xlu0 %1318
        %v1320 = vsel %vm620, %v1311, %v1313
        %v1321 = vsel %vm620, %v1313, %v1315
        %v1322 = vsel %vm620, %v1315, %v1317
        %v1323 = vsel %vm620, %v1317, %v1319
        %v1328 = vadd.f32 %v1292, %v1320
        %v1329 = vadd.f32 %v1293, %v1321
        %v1330 = vadd.f32 %v1294, %v1322
        %v1331 = vadd.f32 %v1295, %v1323
        %1332 = vset.pattern.permute.xlu0 11
        %1333 = vperm.xlu0 %1332, %v798
        %v1334 = vpop.permute.xlu0 %1333
        %v1336 = vmul.f32 %v1334, %v852
        %v1337 = vmul.f32 %v1334, %v853
        %v1338 = vmul.f32 %v1334, %v854
        %v1339 = vmul.f32 %v1334, %v855
        %v1340 = vmul.f32 %v1334, %v1043
        %1346 = vrot.lane.b32.xlu0 %v1336, 124
        %v1347 = vpop.permute.xlu0 %1346
        %1348 = vrot.lane.b32.xlu0 %v1337, 124
        %v1349 = vpop.permute.xlu0 %1348
        %1350 = vrot.lane.b32.xlu0 %v1338, 124
        %v1351 = vpop.permute.xlu0 %1350
        %1352 = vrot.lane.b32.xlu0 %v1339, 124
        %v1353 = vpop.permute.xlu0 %1352
        %1354 = vrot.lane.b32.xlu0 %v1340, 124
        %v1355 = vpop.permute.xlu0 %1354
        %v1356 = vsel %vm620, %v1347, %v1349
        %v1357 = vsel %vm620, %v1349, %v1351
        %v1358 = vsel %vm620, %v1351, %v1353
        %v1359 = vsel %vm620, %v1353, %v1355
        %v1364 = vadd.f32 %v1328, %v1356
        %v1365 = vadd.f32 %v1329, %v1357
        %v1366 = vadd.f32 %v1330, %v1358
        %v1367 = vadd.f32 %v1331, %v1359
        %1368 = vset.pattern.permute.xlu0 14
        %1369 = vperm.xlu0 %1368, %v798
        %v1370 = vpop.permute.xlu0 %1369
        %v1372 = vmul.f32 %v1370, %v868
        %v1373 = vmul.f32 %v1370, %v869
        %v1374 = vmul.f32 %v1370, %v870
        %v1375 = vmul.f32 %v1370, %v871
        %v1376 = vmul.f32 %v1370, %v1080
        %1382 = vrot.lane.b32.xlu0 %v1372, 124
        %v1383 = vpop.permute.xlu0 %1382
        %1384 = vrot.lane.b32.xlu0 %v1373, 124
        %v1385 = vpop.permute.xlu0 %1384
        %1386 = vrot.lane.b32.xlu0 %v1374, 124
        %v1387 = vpop.permute.xlu0 %1386
        %1388 = vrot.lane.b32.xlu0 %v1375, 124
        %v1389 = vpop.permute.xlu0 %1388
        %1390 = vrot.lane.b32.xlu0 %v1376, 124
        %v1391 = vpop.permute.xlu0 %1390
        %v1392 = vsel %vm620, %v1383, %v1385
        %v1393 = vsel %vm620, %v1385, %v1387
        %v1394 = vsel %vm620, %v1387, %v1389
        %v1395 = vsel %vm620, %v1389, %v1391
        %v1400 = vadd.f32 %v1364, %v1392
        %v1401 = vadd.f32 %v1365, %v1393
        %v1402 = vadd.f32 %v1366, %v1394
        %v1403 = vadd.f32 %v1367, %v1395
        %1404 = vset.pattern.permute.xlu0 17
        %1405 = vperm.xlu0 %1404, %v798
        %v1406 = vpop.permute.xlu0 %1405
        %v1408 = vmul.f32 %v1406, %v884
        %v1409 = vmul.f32 %v1406, %v885
        %v1410 = vmul.f32 %v1406, %v886
        %v1411 = vmul.f32 %v1406, %v887
        %v1412 = vmul.f32 %v1406, %v1117
        %1418 = vrot.lane.b32.xlu0 %v1408, 124
        %v1419 = vpop.permute.xlu0 %1418
        %1420 = vrot.lane.b32.xlu0 %v1409, 124
        %v1421 = vpop.permute.xlu0 %1420
        %1422 = vrot.lane.b32.xlu0 %v1410, 124
        %v1423 = vpop.permute.xlu0 %1422
        %1424 = vrot.lane.b32.xlu0 %v1411, 124
        %v1425 = vpop.permute.xlu0 %1424
        %1426 = vrot.lane.b32.xlu0 %v1412, 124
        %v1427 = vpop.permute.xlu0 %1426
        %v1428 = vsel %vm620, %v1419, %v1421
        %v1429 = vsel %vm620, %v1421, %v1423
        %v1430 = vsel %vm620, %v1423, %v1425
        %v1431 = vsel %vm620, %v1425, %v1427
        %v1436 = vadd.f32 %v1400, %v1428
        %v1437 = vadd.f32 %v1401, %v1429
        %v1438 = vadd.f32 %v1402, %v1430
        %v1439 = vadd.f32 %v1403, %v1431
        %1440 = vset.pattern.permute.xlu0 20
        %1441 = vperm.xlu0 %1440, %v798
        %v1442 = vpop.permute.xlu0 %1441
        %v1444 = vmul.f32 %v1442, %v900
        %v1445 = vmul.f32 %v1442, %v901
        %v1446 = vmul.f32 %v1442, %v902
        %v1447 = vmul.f32 %v1442, %v903
        %v1448 = vmul.f32 %v1442, %v1154
        %1454 = vrot.lane.b32.xlu0 %v1444, 124
        %v1455 = vpop.permute.xlu0 %1454
        %1456 = vrot.lane.b32.xlu0 %v1445, 124
        %v1457 = vpop.permute.xlu0 %1456
        %1458 = vrot.lane.b32.xlu0 %v1446, 124
        %v1459 = vpop.permute.xlu0 %1458
        %1460 = vrot.lane.b32.xlu0 %v1447, 124
        %v1461 = vpop.permute.xlu0 %1460
        %1462 = vrot.lane.b32.xlu0 %v1448, 124
        %v1463 = vpop.permute.xlu0 %1462
        %v1464 = vsel %vm620, %v1455, %v1457
        %v1465 = vsel %vm620, %v1457, %v1459
        %v1466 = vsel %vm620, %v1459, %v1461
        %v1467 = vsel %vm620, %v1461, %v1463
        %v1472 = vadd.f32 %v1436, %v1464
        %v1473 = vadd.f32 %v1437, %v1465
        %v1474 = vadd.f32 %v1438, %v1466
        %v1475 = vadd.f32 %v1439, %v1467
        %1476 = vset.pattern.permute.xlu0 23
        %1477 = vperm.xlu0 %1476, %v798
        %v1478 = vpop.permute.xlu0 %1477
        %v1480 = vmul.f32 %v1478, %v916
        %v1481 = vmul.f32 %v1478, %v917
        %v1482 = vmul.f32 %v1478, %v918
        %v1483 = vmul.f32 %v1478, %v919
        %v1484 = vmul.f32 %v1478, %v1191
        %1490 = vrot.lane.b32.xlu0 %v1480, 124
        %v1491 = vpop.permute.xlu0 %1490
        %1492 = vrot.lane.b32.xlu0 %v1481, 124
        %v1493 = vpop.permute.xlu0 %1492
        %1494 = vrot.lane.b32.xlu0 %v1482, 124
        %v1495 = vpop.permute.xlu0 %1494
        %1496 = vrot.lane.b32.xlu0 %v1483, 124
        %v1497 = vpop.permute.xlu0 %1496
        %1498 = vrot.lane.b32.xlu0 %v1484, 124
        %v1499 = vpop.permute.xlu0 %1498
        %v1500 = vsel %vm620, %v1491, %v1493
        %v1501 = vsel %vm620, %v1493, %v1495
        %v1502 = vsel %vm620, %v1495, %v1497
        %v1503 = vsel %vm620, %v1497, %v1499
        %v1508 = vadd.f32 %v1472, %v1500
        %v1509 = vadd.f32 %v1473, %v1501
        %v1510 = vadd.f32 %v1474, %v1502
        %v1511 = vadd.f32 %v1475, %v1503
        %v1512 = vxor.u32 %v1508, 2147483648
        %v1513 = vxor.u32 %v1509, 2147483648
        %v1514 = vxor.u32 %v1510, 2147483648
        %v1515 = vxor.u32 %v1511, 2147483648
        %v1516 = vmul.f32 %v1512, 1.442695
        %v1517 = vpow.pop %v1516
        %v1518 = vmul.f32 %v1513, 1.442695
        %v1519 = vpow.pop %v1518
        %v1520 = vmul.f32 %v1514, 1.442695
        %v1521 = vpow.pop %v1520
        %v1522 = vmul.f32 %v1515, 1.442695
        %v1523 = vpow.pop %v1522
        %v1524 = vadd.f32 %v1517, 1.0
        %v1525 = vadd.f32 %v1519, 1.0
        %v1526 = vadd.f32 %v1521, 1.0
        %v1527 = vadd.f32 %v1523, 1.0
        %v1528 = vrcp.pop %v1524
        %v1529 = vmul.f32 %v1524, %v1528
        %v1530 = vsub.f32 1.0, %v1529
        %v1531 = vmul.f32 %v1528, %v1530
        %v1532 = vadd.f32 %v1528, %v1531
        %vm1533 = vweird.f32 %v1524
        %vm1534 = vweird.f32 %v1528
        %vm1535 = vmor %vm1533, %vm1534
        %v1536 = vsel %vm1535, %v1528, %v1532
        %v1537 = vand.u32 2147483647, %v1524
        %vm1538 = vcmp.eq.f32.partialorder %v1537, 8.507059e+37
        %v1539 = vand.u32 %v1524, 2147483648
        %v1540 = vor.u32 1.1754944e-38, %v1539
        %v1541 = vsel %vm1538, %v1540, %v1536
        %v1542 = vmul.f32 1.0, %v1541
        %v1543 = vrcp.pop %v1525
        %v1544 = vmul.f32 %v1525, %v1543
        %v1545 = vsub.f32 1.0, %v1544
        %v1546 = vmul.f32 %v1543, %v1545
        %v1547 = vadd.f32 %v1543, %v1546
        %vm1548 = vweird.f32 %v1525
        %vm1549 = vweird.f32 %v1543
        %vm1550 = vmor %vm1548, %vm1549
        %v1551 = vsel %vm1550, %v1543, %v1547
        %v1552 = vand.u32 2147483647, %v1525
        %vm1553 = vcmp.eq.f32.partialorder %v1552, 8.507059e+37
        %v1554 = vand.u32 %v1525, 2147483648
        %v1555 = vor.u32 1.1754944e-38, %v1554
        %v1556 = vsel %vm1553, %v1555, %v1551
        %v1557 = vmul.f32 1.0, %v1556
        %v1558 = vrcp.pop %v1526
        %v1559 = vmul.f32 %v1526, %v1558
        %v1560 = vsub.f32 1.0, %v1559
        %v1561 = vmul.f32 %v1558, %v1560
        %v1562 = vadd.f32 %v1558, %v1561
        %vm1563 = vweird.f32 %v1526
        %vm1564 = vweird.f32 %v1558
        %vm1565 = vmor %vm1563, %vm1564
        %v1566 = vsel %vm1565, %v1558, %v1562
        %v1567 = vand.u32 2147483647, %v1526
        %vm1568 = vcmp.eq.f32.partialorder %v1567, 8.507059e+37
        %v1569 = vand.u32 %v1526, 2147483648
        %v1570 = vor.u32 1.1754944e-38, %v1569
        %v1571 = vsel %vm1568, %v1570, %v1566
        %v1572 = vmul.f32 1.0, %v1571
        %v1573 = vrcp.pop %v1527
        %v1574 = vmul.f32 %v1527, %v1573
        %v1575 = vsub.f32 1.0, %v1574
        %v1576 = vmul.f32 %v1573, %v1575
        %v1577 = vadd.f32 %v1573, %v1576
        %vm1578 = vweird.f32 %v1527
        %vm1579 = vweird.f32 %v1573
        %vm1580 = vmor %vm1578, %vm1579
        %v1581 = vsel %vm1580, %v1573, %v1577
        %v1582 = vand.u32 2147483647, %v1527
        %vm1583 = vcmp.eq.f32.partialorder %v1582, 8.507059e+37
        %v1584 = vand.u32 %v1527, 2147483648
        %v1585 = vor.u32 1.1754944e-38, %v1584
        %v1586 = vsel %vm1583, %v1585, %v1581
        %v1587 = vmul.f32 1.0, %v1586
        %v1588 = vmul.f32 %v1508, %v1542
        %v1589 = vmul.f32 %v1509, %v1557
        %v1590 = vmul.f32 %v1510, %v1572
        %v1591 = vmul.f32 %v1511, %v1587
        %1592 = vst [vmem:[%s256] sm:$0xff] %v1588
        %1593 = vst [vmem:[%s256 + $0x8] sm:$0xff] %v1589
        %1594 = vst [vmem:[%s256 + $0x10] sm:$0xff] %v1590
        %1595 = vst [vmem:[%s256 + $0x18] sm:$0xff] %v1591
        %s1596 = sand.u32 %s154, 1
        %s1597 = scalar_lea.sflag [#allocation5], %s1596
        %s1598 = sand.u32 %s154, 1
        %s1599 = smul.addr %s1598, 32
        %s1600 = scalar_lea.vmem [#allocation6], %s1599
        // Predicated region
        $region49: #{tpu_custom_call.1} parent=39 // pred_check
          %p1601 = pneg %p164
        $region50: #{tpu_custom_call.1} parent=39 // pred_check_branch
          %1603 = sbr.rel (%p1601) target = $region52
        $region51: #{tpu_custom_call.1} parent=39 // pred_region
          %s1604 = smul.u32 4, %s27
          %1606 = vsyncadd %s1597, 0
          %s1607 = smul.addr %s26, 8
          %s1608 = sadd.s32 %s1604, %s1607
          %s1609 = smul.addr %s1608, 8
          %s1610 = scalar_lea.hbm %s5, %s1609
          %s1612 = sshll.u32 %s1600, 4
          %s1613 = int_to_ptr.vmem [resolvable:$true] %s1612
          %s1614 = sshll.u32 %s1610, 4
          %s1615 = int_to_ptr.hbm [resolvable:$true] %s1614
          %1617 = dma.vmem_to_hbm [thread:$0]  %s1613, 512, %s1615, %s1597
        $region52: #{tpu_custom_call.1} parent=39 // pred_fallthru
          _
      $region40: #{tpu_custom_call.1} parent=5 // pred_fallthru
        _
      %p1618 = scmp.le.s32.totalorder 2, %s17
      // Predicated region
      $region53: #{tpu_custom_call.1} parent=5 // pred_check
        %p1619 = pneg %p1618
      $region54: #{tpu_custom_call.1} parent=5 // pred_check_branch
        %1621 = sbr.rel (%p1619) target = $region56
      $region55: #{tpu_custom_call.1} parent=5 // pred_region
        %s1622 = ssub.s32 %s17, 2
        // Predicated region
        $region57: #{tpu_custom_call.1} parent=55 // pred_check
          %p1623 = pneg %p170
        $region58: #{tpu_custom_call.1} parent=55 // pred_check_branch
          %1625 = sbr.rel (%p1623) target = $region60
        $region59: #{tpu_custom_call.1} parent=55 // pred_region
          %s1626 = sand.u32 %s155, 1
          %s1627 = scalar_lea.sflag [#allocation5], %s1626
          %s1628 = sand.u32 %s155, 1
          %s1629 = smul.addr %s1628, 32
          %s1630 = scalar_lea.vmem [#allocation6], %s1629
          %1632 = dma.done %s1627, 512
        $region60: #{tpu_custom_call.1} parent=55 // pred_fallthru
          _
      $region56: #{tpu_custom_call.1} parent=5 // pred_fallthru
        _
    $region6: #{tpu_custom_call.1} parent=1 // loop_footer
      %s21 = sadd.s32 1, %s17
    $region7: #{tpu_custom_call.1} parent=1 // loop_footer_branch
      %16 = sbr.rel target = $region3
    $region8: #{tpu_custom_call.1} parent=1 // loop_exit
      _
    %1633 = vsyncpa [#allocation4], 1
    %s1634 = scalar_lea.sflag [#allocation4], 1
    %1635 = vsyncpa %s1634, 1
    %1636 = vsyncpa [#allocation5], 1
    %s1637 = scalar_lea.sflag [#allocation5], 1
    %1638 = vsyncpa %s1637, 1

</llo_original>
